<compile_context>
chip_gen: v7x
topology: tpu7x:2x2x1
jax: 0.10.0
libtpu: 0.0.40
codegen_flags: <defaults>
</compile_context>

<pallas_src>
import jax
import jax.numpy as jnp
from jax.experimental import pallas as pl
from jax.experimental.pallas import tpu as pltpu

EPSILON = 1e-9
_NEG_BIG = -1e30  # pad-class bias sentinel; safe only while bias/logits are f32


def _fusion_kernel(x1_ref, x2_ref, w1_ref, b1_ref, w2_ref, b2_ref, lab_ref,
                   x1_lp_ref, x2_lp_ref, avg_lp_ref, nll_ref):
    # ---- classifier heads: bf16 operands on the MXU, f32 accumulation ----
    z1 = jnp.dot(x1_ref[...], w1_ref[...],
                 preferred_element_type=jnp.float32) + b1_ref[...]
    z2 = jnp.dot(x2_ref[...], w2_ref[...],
                 preferred_element_type=jnp.float32) + b2_ref[...]

    # ---- softmax pieces (dim=1 in torch), f32 epilogue ----
    m1 = jnp.max(z1, axis=-1, keepdims=True)
    m2 = jnp.max(z2, axis=-1, keepdims=True)
    e1 = jnp.exp(z1 - m1)
    e2 = jnp.exp(z2 - m2)
    s1 = jnp.sum(e1, axis=-1, keepdims=True)
    s2 = jnp.sum(e2, axis=-1, keepdims=True)

    # Analytic log-softmax for the per-modality log-probs: one (TB,1) log per
    # head instead of a full-tile log(p + eps).  Matches log(p + eps) wherever
    # p >> eps; pad / underflowed classes differ but are sliced away.
    lp1 = (z1 - m1) - jnp.log(s1)
    lp2 = (z2 - m2) - jnp.log(s2)

    # Probabilities only needed for the averaged path (approx recip -> EUP slot).
    p1 = e1 * pl.reciprocal(s1, approx=True)
    p2 = e2 * pl.reciprocal(s2, approx=True)
    avg = (p1 + p2) * 0.5
    lpa = jnp.log(avg + EPSILON)

    x1_lp_ref[...] = lp1.astype(x1_lp_ref.dtype)
    x2_lp_ref[...] = lp2.astype(x2_lp_ref.dtype)
    avg_lp_ref[...] = lpa.astype(avg_lp_ref.dtype)

    # ---- per-sample NLL on averaged log-probs (f32; pad classes never hit) ----
    tb, cp = lpa.shape
    cls_ids = jax.lax.broadcasted_iota(jnp.int32, (tb, cp), 1)       # (TB, CP)
    onehot = (cls_ids == lab_ref[...]).astype(jnp.float32)           # (TB, CP)
    nll_ref[...] = -jnp.sum(lpa * onehot, axis=-1, keepdims=True)    # (TB, 1)


def _round8(n):
    return max(8, ((int(n) + 7) // 8) * 8)


def _pick_tile_b(B, tile_b):
    """Batch tile: multiple of 8, <= tile_b, and >= 2 grid steps when possible
    so both v7x TensorCores get work under the 'parallel' batch axis."""
    tile_b = _round8(tile_b)
    if B <= tile_b:
        half = _round8(pl.cdiv(B, 2))
        full = _round8(B)
        return half if half < full else full
    return tile_b


def _prep_activation(x, BP, dtype):
    """Cast/pad only when necessary (skips whole HBM passes when not needed)."""
    B = x.shape[0]
    if x.dtype != dtype:
        x = x.astype(dtype)
    if B != BP:
        x = jnp.zeros((BP, x.shape[1]), dtype).at[:B].set(x)
    return x


def fusion_net_forward(x1_feat, x2_cls, label, params, *, tile_b=512,
                       logprob_dtype=jnp.bfloat16, return_padded=False):
    """Train-mode forward of FusionNet (istrain=True path).

    Args:
      x1_feat: (B, F1) — ResNet50 pooled features (bf16 preferred, f32 accepted).
      x2_cls:  (B, F2) — BERT CLS hidden states.
      label:   (B,)    int labels.
      params:  dict with w1 (F1,C), b1 (C,), w2 (F2,C), b2 (C,).
      return_padded: if True, skip the output [:B, :C] slice pass and return the
        padded (BP, 128) log-prob arrays (downstream must mask cols >= C, rows >= B).

    Returns: (x1_logprobs, x2_logprobs, avg_logprobs, loss) — loss is mean NLL.
    """
    B, F1 = x1_feat.shape
    _, F2 = x2_cls.shape
    C = params["w1"].shape[1]

    f32, bf16 = jnp.float32, jnp.bfloat16

    # Lane-dense class dimension (multiple of 128).
    CP = pl.cdiv(C, 128) * 128

    # Batch tiling.
    TB = _pick_tile_b(B, tile_b)
    G = pl.cdiv(B, TB)
    BP = G * TB

    # ---- wrapper-side prep (no-ops when inputs are already bf16 / aligned) ----
    x1 = _prep_activation(x1_feat, BP, bf16)
    x2 = _prep_activation(x2_cls, BP, bf16)
    lab = label.astype(jnp.int32).reshape(B, 1)
    if BP != B:
        lab = jnp.zeros((BP, 1), jnp.int32).at[:B].set(lab)

    # Weights: zero pad cols; bias pad entries -1e30 so padded logits vanish
    # under softmax.  Bias must remain f32 for the sentinel to be safe.
    w1 = jnp.zeros((F1, CP), bf16).at[:, :C].set(params["w1"].astype(bf16))
    w2 = jnp.zeros((F2, CP), bf16).at[:, :C].set(params["w2"].astype(bf16))
    b1 = jnp.full((1, CP), _NEG_BIG, f32).at[0, :C].set(params["b1"].astype(f32))
    b2 = jnp.full((1, CP), _NEG_BIG, f32).at[0, :C].set(params["b2"].astype(f32))

    lp1, lp2, lpa, nll = pl.pallas_call(
        _fusion_kernel,
        grid=(G,),
        out_shape=(
            jax.ShapeDtypeStruct((BP, CP), logprob_dtype),   # x1_logprobs
            jax.ShapeDtypeStruct((BP, CP), logprob_dtype),   # x2_logprobs
            jax.ShapeDtypeStruct((BP, CP), logprob_dtype),   # avg_logprobs
            jax.ShapeDtypeStruct((BP, 1), f32),              # per-sample NLL
        ),
        in_specs=[
            pl.BlockSpec((TB, F1), lambda i: (i, 0)),   # x1 tile
            pl.BlockSpec((TB, F2), lambda i: (i, 0)),   # x2 tile
            pl.BlockSpec((F1, CP), lambda i: (0, 0)),   # w1 (VMEM-resident)
            pl.BlockSpec((1, CP), lambda i: (0, 0)),    # b1
            pl.BlockSpec((F2, CP), lambda i: (0, 0)),   # w2 (VMEM-resident)
            pl.BlockSpec((1, CP), lambda i: (0, 0)),    # b2
            pl.BlockSpec((TB, 1), lambda i: (i, 0)),    # labels
        ],
        out_specs=(
            pl.BlockSpec((TB, CP), lambda i: (i, 0)),
            pl.BlockSpec((TB, CP), lambda i: (i, 0)),
            pl.BlockSpec((TB, CP), lambda i: (i, 0)),
            pl.BlockSpec((TB, 1), lambda i: (i, 0)),
        ),
        compiler_params=pltpu.CompilerParams(
            dimension_semantics=("parallel",),
            vmem_limit_bytes=(96 << 20) if TB >= 1024 else None),
    )(x1, x2, w1, b1, w2, b2, lab)

    # Mean NLL over the true batch (padded rows excluded).
    loss = jnp.sum(nll[:B, 0]) / jnp.float32(B)
    if return_padded:
        return lp1, lp2, lpa, loss
    return lp1[:B, :C], lp2[:B, :C], lpa[:B, :C], loss


def _reference(x1_feat, x2_cls, label, params, operand_dtype=None):
    """Pure-JAX reference. operand_dtype=bf16 mirrors the kernel's MXU numerics."""
    x1, x2 = x1_feat, x2_cls
    w1, w2 = params["w1"], params["w2"]
    if operand_dtype is not None:
        x1, x2 = x1.astype(operand_dtype), x2.astype(operand_dtype)
        w1, w2 = w1.astype(operand_dtype), w2.astype(operand_dtype)
    l1 = jnp.dot(x1, w1, preferred_element_type=jnp.float32) + params["b1"]
    l2 = jnp.dot(x2, w2, preferred_element_type=jnp.float32) + params["b2"]
    p1 = jax.nn.softmax(l1, axis=1)
    p2 = jax.nn.softmax(l2, axis=1)
    avg = (p1 + p2) / 2
    lp1 = jnp.log(p1 + EPSILON)
    lp2 = jnp.log(p2 + EPSILON)
    lpa = jnp.log(avg + EPSILON)
    loss = -jnp.mean(jnp.take_along_axis(lpa, label[:, None], axis=1))
    return lp1, lp2, lpa, loss


def _check(out, ref, lp_atol, loss_atol, tag):
    lp1, lp2, lpa, loss = out
    r1, r2, ra, rl = ref
    assert jnp.allclose(lp1.astype(jnp.float32), r1, atol=lp_atol), f"x1 lp mismatch ({tag})"
    assert jnp.allclose(lp2.astype(jnp.float32), r2, atol=lp_atol), f"x2 lp mismatch ({tag})"
    assert jnp.allclose(lpa.astype(jnp.float32), ra, atol=lp_atol), f"avg lp mismatch ({tag})"
    assert jnp.allclose(loss, rl, atol=loss_atol), f"loss mismatch ({tag})"


if __name__ == "__main__":
    F1 = 2048        # resnet50 fc in_features
    F2 = 768         # bert hidden size
    C = 101          # num_classes (food101)

    key = jax.random.PRNGKey(0)
    k1, k2, k3, k4, k5, k6, k7 = jax.random.split(key, 7)

    # deterministic head parameters (nn.Linear-style init scale)
    params = {
        "w1": jax.random.uniform(k4, (F1, C), jnp.float32, -1.0, 1.0) / jnp.sqrt(F1),
        "b1": jax.random.uniform(k5, (C,), jnp.float32, -1.0, 1.0) / jnp.sqrt(F1),
        "w2": jax.random.uniform(k6, (F2, C), jnp.float32, -1.0, 1.0) / jnp.sqrt(F2),
        "b2": jax.random.uniform(k7, (C,), jnp.float32, -1.0, 1.0) / jnp.sqrt(F2),
    }

    for B in (8, 24):   # B=8: single tile; B=24: multi-tile + batch-pad path
        kk1, kk2, kk3 = jax.random.fold_in(k1, B), jax.random.fold_in(k2, B), jax.random.fold_in(k3, B)
        # synthetic frozen-backbone features, emitted in bf16 (backbone contract)
        x1_feat = jax.random.normal(kk1, (B, F1), jnp.float32).astype(jnp.bfloat16)
        x2_cls = jax.random.normal(kk2, (B, F2), jnp.float32).astype(jnp.bfloat16)
        label = jax.random.randint(kk3, (B,), 0, C, jnp.int32)

        out = fusion_net_forward(x1_feat, x2_cls, label, params)
        jax.block_until_ready(out)

        # Tight-ish check vs. a reference mirroring the kernel's bf16-operand matmul
        # (lp atol dominated by bf16 output rounding of O(1..8) log-probs).
        ref_bf16 = _reference(x1_feat, x2_cls, label, params, operand_dtype=jnp.bfloat16)
        _check(out, ref_bf16, lp_atol=5e-2, loss_atol=5e-3, tag=f"bf16 ref, B={B}")

        # Looser sanity check vs. the f32-weight reference (adds bf16 weight quantization).
        ref_f32 = _reference(x1_feat, x2_cls, label, params)
        _check(out, ref_f32, lp_atol=7e-2, loss_atol=2e-2, tag=f"f32 ref, B={B}")

    print("KERNEL_OK")
</pallas_src>

<mosaic_0001>
module attributes {stable_mosaic.version = 11 : i64} {
  func.func @_fusion_kernel(%arg0: i32, %arg1: memref<8x2048xbf16, #tpu.memory_space<vmem>>, %arg2: memref<8x768xbf16, #tpu.memory_space<vmem>>, %arg3: memref<2048x128xbf16, #tpu.memory_space<vmem>>, %arg4: memref<1x128xf32, #tpu.memory_space<vmem>>, %arg5: memref<768x128xbf16, #tpu.memory_space<vmem>>, %arg6: memref<1x128xf32, #tpu.memory_space<vmem>>, %arg7: memref<8x1xi32, #tpu.memory_space<vmem>>, %arg8: memref<8x128xbf16, #tpu.memory_space<vmem>>, %arg9: memref<8x128xbf16, #tpu.memory_space<vmem>>, %arg10: memref<8x128xbf16, #tpu.memory_space<vmem>>, %arg11: memref<8x1xf32, #tpu.memory_space<vmem>>) attributes {dimension_semantics = [#tpu.dimension_semantics<parallel>], iteration_bounds = array<i64: 1>, scalar_prefetch = 0 : i64, scratch_operands = 0 : i64, tpu.core_type = #tpu.core_type<tc>, window_params = [{transform_indices = @transform_0, window_bounds = array<i64: 8, 2048>}, {transform_indices = @transform_1, window_bounds = array<i64: 8, 768>}, {pipeline_mode = #tpu.pipeline_mode<synchronous>, transform_indices = @transform_2, window_bounds = array<i64: 2048, 128>}, {pipeline_mode = #tpu.pipeline_mode<synchronous>, transform_indices = @transform_3, window_bounds = array<i64: 1, 128>}, {pipeline_mode = #tpu.pipeline_mode<synchronous>, transform_indices = @transform_4, window_bounds = array<i64: 768, 128>}, {pipeline_mode = #tpu.pipeline_mode<synchronous>, transform_indices = @transform_5, window_bounds = array<i64: 1, 128>}, {transform_indices = @transform_6, window_bounds = array<i64: 8, 1>}, {transform_indices = @transform_7, window_bounds = array<i64: 8, 128>}, {transform_indices = @transform_8, window_bounds = array<i64: 8, 128>}, {transform_indices = @transform_9, window_bounds = array<i64: 8, 128>}, {transform_indices = @transform_10, window_bounds = array<i64: 8, 1>}]} {
    %c0 = arith.constant 0 : index
    %c0_0 = arith.constant 0 : index
    %0 = vector.load %arg1[%c0, %c0_0] : memref<8x2048xbf16, #tpu.memory_space<vmem>>, vector<8x2048xbf16>
    %c0_1 = arith.constant 0 : index
    %c0_2 = arith.constant 0 : index
    %1 = vector.load %arg3[%c0_1, %c0_2] : memref<2048x128xbf16, #tpu.memory_space<vmem>>, vector<2048x128xbf16>
    %cst = arith.constant dense<0.000000e+00> : vector<8x128xf32>
    %2 = tpu.matmul %0, %1, %cst {dimension_numbers = #tpu.dot_dimension_numbers<[1], [0], [0], [1], [0, 0, 1, 1], [], []>} : vector<8x2048xbf16>, vector<2048x128xbf16>, vector<8x128xf32> -> vector<8x128xf32>
    %c0_3 = arith.constant 0 : index
    %c0_4 = arith.constant 0 : index
    %3 = vector.load %arg4[%c0_3, %c0_4] : memref<1x128xf32, #tpu.memory_space<vmem>>, vector<1x128xf32>
    %4 = vector.broadcast %3 : vector<1x128xf32> to vector<8x128xf32>
    %5 = arith.addf %2, %4 : vector<8x128xf32>
    %c0_5 = arith.constant 0 : index
    %c0_6 = arith.constant 0 : index
    %6 = vector.load %arg2[%c0_5, %c0_6] : memref<8x768xbf16, #tpu.memory_space<vmem>>, vector<8x768xbf16>
    %c0_7 = arith.constant 0 : index
    %c0_8 = arith.constant 0 : index
    %7 = vector.load %arg5[%c0_7, %c0_8] : memref<768x128xbf16, #tpu.memory_space<vmem>>, vector<768x128xbf16>
    %cst_9 = arith.constant dense<0.000000e+00> : vector<8x128xf32>
    %8 = tpu.matmul %6, %7, %cst_9 {dimension_numbers = #tpu.dot_dimension_numbers<[1], [0], [0], [1], [0, 0, 1, 1], [], []>} : vector<8x768xbf16>, vector<768x128xbf16>, vector<8x128xf32> -> vector<8x128xf32>
    %c0_10 = arith.constant 0 : index
    %c0_11 = arith.constant 0 : index
    %9 = vector.load %arg6[%c0_10, %c0_11] : memref<1x128xf32, #tpu.memory_space<vmem>>, vector<1x128xf32>
    %10 = vector.broadcast %9 : vector<1x128xf32> to vector<8x128xf32>
    %11 = arith.addf %8, %10 : vector<8x128xf32>
    %cst_12 = arith.constant dense<0xFF800000> : vector<8xf32>
    %12 = vector.multi_reduction <maximumf>, %5, %cst_12 [1] : vector<8x128xf32> to vector<8xf32>
    %13 = vector.shape_cast %12 : vector<8xf32> to vector<8x1xf32>
    %cst_13 = arith.constant dense<0xFF800000> : vector<8xf32>
    %14 = vector.multi_reduction <maximumf>, %11, %cst_13 [1] : vector<8x128xf32> to vector<8xf32>
    %15 = vector.shape_cast %14 : vector<8xf32> to vector<8x1xf32>
    %16 = vector.broadcast %13 : vector<8x1xf32> to vector<8x128xf32>
    %17 = arith.subf %5, %16 : vector<8x128xf32>
    %18 = math.exp %17 : vector<8x128xf32>
    %19 = vector.broadcast %15 : vector<8x1xf32> to vector<8x128xf32>
    %20 = arith.subf %11, %19 : vector<8x128xf32>
    %21 = math.exp %20 : vector<8x128xf32>
    %cst_14 = arith.constant dense<0.000000e+00> : vector<8xf32>
    %22 = vector.multi_reduction <add>, %18, %cst_14 [1] : vector<8x128xf32> to vector<8xf32>
    %23 = vector.shape_cast %22 : vector<8xf32> to vector<8x1xf32>
    %cst_15 = arith.constant dense<0.000000e+00> : vector<8xf32>
    %24 = vector.multi_reduction <add>, %21, %cst_15 [1] : vector<8x128xf32> to vector<8xf32>
    %25 = vector.shape_cast %24 : vector<8xf32> to vector<8x1xf32>
    %26 = vector.broadcast %13 : vector<8x1xf32> to vector<8x128xf32>
    %27 = arith.subf %5, %26 : vector<8x128xf32>
    %28 = math.log %23 : vector<8x1xf32>
    %29 = vector.broadcast %28 : vector<8x1xf32> to vector<8x128xf32>
    %30 = arith.subf %27, %29 : vector<8x128xf32>
    %31 = vector.broadcast %15 : vector<8x1xf32> to vector<8x128xf32>
    %32 = arith.subf %11, %31 : vector<8x128xf32>
    %33 = math.log %25 : vector<8x1xf32>
    %34 = vector.broadcast %33 : vector<8x1xf32> to vector<8x128xf32>
    %35 = arith.subf %32, %34 : vector<8x128xf32>
    %36 = tpu.reciprocal %23 {approx = true} : vector<8x1xf32> -> vector<8x1xf32>
    %37 = vector.broadcast %36 : vector<8x1xf32> to vector<8x128xf32>
    %38 = arith.mulf %18, %37 : vector<8x128xf32>
    %39 = tpu.reciprocal %25 {approx = true} : vector<8x1xf32> -> vector<8x1xf32>
    %40 = vector.broadcast %39 : vector<8x1xf32> to vector<8x128xf32>
    %41 = arith.mulf %21, %40 : vector<8x128xf32>
    %42 = arith.addf %38, %41 : vector<8x128xf32>
    %cst_16 = arith.constant 5.000000e-01 : f32
    %43 = vector.broadcast %cst_16 : f32 to vector<8x128xf32>
    %44 = arith.mulf %42, %43 : vector<8x128xf32>
    %cst_17 = arith.constant 9.99999971E-10 : f32
    %45 = vector.broadcast %cst_17 : f32 to vector<8x128xf32>
    %46 = arith.addf %44, %45 : vector<8x128xf32>
    %47 = math.log %46 : vector<8x128xf32>
    %48 = arith.truncf %30 : vector<8x128xf32> to vector<8x128xbf16>
    %c0_18 = arith.constant 0 : index
    %c0_19 = arith.constant 0 : index
    %49 = vector.load %arg8[%c0_18, %c0_19] : memref<8x128xbf16, #tpu.memory_space<vmem>>, vector<8x128xbf16>
    tpu.vector_store %arg8[%c0_18, %c0_19], %48 {strides = array<i32>} : memref<8x128xbf16, #tpu.memory_space<vmem>>, vector<8x128xbf16>,
    %50 = arith.truncf %35 : vector<8x128xf32> to vector<8x128xbf16>
    %c0_20 = arith.constant 0 : index
    %c0_21 = arith.constant 0 : index
    %51 = vector.load %arg9[%c0_20, %c0_21] : memref<8x128xbf16, #tpu.memory_space<vmem>>, vector<8x128xbf16>
    tpu.vector_store %arg9[%c0_20, %c0_21], %50 {strides = array<i32>} : memref<8x128xbf16, #tpu.memory_space<vmem>>, vector<8x128xbf16>,
    %52 = arith.truncf %47 : vector<8x128xf32> to vector<8x128xbf16>
    %c0_22 = arith.constant 0 : index
    %c0_23 = arith.constant 0 : index
    %53 = vector.load %arg10[%c0_22, %c0_23] : memref<8x128xbf16, #tpu.memory_space<vmem>>, vector<8x128xbf16>
    tpu.vector_store %arg10[%c0_22, %c0_23], %52 {strides = array<i32>} : memref<8x128xbf16, #tpu.memory_space<vmem>>, vector<8x128xbf16>,
    %54 = tpu.iota {dimensions = array<i32: 1>} : vector<8x128xi32>
    %c0_24 = arith.constant 0 : index
    %c0_25 = arith.constant 0 : index
    %55 = vector.load %arg7[%c0_24, %c0_25] : memref<8x1xi32, #tpu.memory_space<vmem>>, vector<8x1xi32>
    %56 = vector.broadcast %55 : vector<8x1xi32> to vector<8x128xi32>
    %57 = arith.cmpi eq, %54, %56 : vector<8x128xi32>
    %58 = arith.extui %57 : vector<8x128xi1> to vector<8x128xi32>
    %59 = arith.sitofp %58 : vector<8x128xi32> to vector<8x128xf32>
    %60 = arith.mulf %47, %59 : vector<8x128xf32>
    %cst_26 = arith.constant dense<0.000000e+00> : vector<8xf32>
    %61 = vector.multi_reduction <add>, %60, %cst_26 [1] : vector<8x128xf32> to vector<8xf32>
    %62 = vector.shape_cast %61 : vector<8xf32> to vector<8x1xf32>
    %cst_27 = arith.constant 0.000000e+00 : f32
    %63 = vector.broadcast %cst_27 : f32 to vector<8x1xf32>
    %64 = arith.subf %63, %62 : vector<8x1xf32>
    %c0_28 = arith.constant 0 : index
    %c0_29 = arith.constant 0 : index
    %65 = vector.load %arg11[%c0_28, %c0_29] : memref<8x1xf32, #tpu.memory_space<vmem>>, vector<8x1xf32>
    tpu.vector_store %arg11[%c0_28, %c0_29], %64 {strides = array<i32>} : memref<8x1xf32, #tpu.memory_space<vmem>>, vector<8x1xf32>,
    return
  }
  func.func @transform_0(%arg0: i32) -> (i32, i32) {
    %c0_i32 = arith.constant 0 : i32
    %c0_i32_0 = arith.constant 0 : i32
    return %arg0, %c0_i32 : i32, i32
  }
  func.func @transform_1(%arg0: i32) -> (i32, i32) {
    %c0_i32 = arith.constant 0 : i32
    %c0_i32_0 = arith.constant 0 : i32
    return %arg0, %c0_i32 : i32, i32
  }
  func.func @transform_2(%arg0: i32) -> (i32, i32) {
    %c0_i32 = arith.constant 0 : i32
    %c0_i32_0 = arith.constant 0 : i32
    %c0_i32_1 = arith.constant 0 : i32
    return %c0_i32, %c0_i32_0 : i32, i32
  }
  func.func @transform_3(%arg0: i32) -> (i32, i32) {
    %c0_i32 = arith.constant 0 : i32
    %c0_i32_0 = arith.constant 0 : i32
    %c0_i32_1 = arith.constant 0 : i32
    return %c0_i32, %c0_i32_0 : i32, i32
  }
  func.func @transform_4(%arg0: i32) -> (i32, i32) {
    %c0_i32 = arith.constant 0 : i32
    %c0_i32_0 = arith.constant 0 : i32
    %c0_i32_1 = arith.constant 0 : i32
    return %c0_i32, %c0_i32_0 : i32, i32
  }
  func.func @transform_5(%arg0: i32) -> (i32, i32) {
    %c0_i32 = arith.constant 0 : i32
    %c0_i32_0 = arith.constant 0 : i32
    %c0_i32_1 = arith.constant 0 : i32
    return %c0_i32, %c0_i32_0 : i32, i32
  }
  func.func @transform_6(%arg0: i32) -> (i32, i32) {
    %c0_i32 = arith.constant 0 : i32
    %c0_i32_0 = arith.constant 0 : i32
    return %arg0, %c0_i32 : i32, i32
  }
  func.func @transform_7(%arg0: i32) -> (i32, i32) {
    %c0_i32 = arith.constant 0 : i32
    %c0_i32_0 = arith.constant 0 : i32
    return %arg0, %c0_i32 : i32, i32
  }
  func.func @transform_8(%arg0: i32) -> (i32, i32) {
    %c0_i32 = arith.constant 0 : i32
    %c0_i32_0 = arith.constant 0 : i32
    return %arg0, %c0_i32 : i32, i32
  }
  func.func @transform_9(%arg0: i32) -> (i32, i32) {
    %c0_i32 = arith.constant 0 : i32
    %c0_i32_0 = arith.constant 0 : i32
    return %arg0, %c0_i32 : i32, i32
  }
  func.func @transform_10(%arg0: i32) -> (i32, i32) {
    %c0_i32 = arith.constant 0 : i32
    %c0_i32_0 = arith.constant 0 : i32
    return %arg0, %c0_i32 : i32, i32
  }
}

</mosaic_0001>

<llo_original>
// kernel: tpu_custom_call.1
$region0: #{tpu_custom_call.1}
  #allocation0 [shape = 'u32[]', space=smem, size = 0x4, offset = 0x4, fixed_abs, tag = 'smem constant byte address 0x4 - core index']
  #allocation1 [shape = 'u32[144,128]{1,0:T(1,128)}', space=vmem, size = 0x12000, scoped, tag = 'internal scratch']
  %s0 = inlined_call_operand.hbm [shape: bf16[8,2048], index: 0, kind: input, shape index: {}]
  %s1 = inlined_call_operand.hbm [shape: bf16[8,768], index: 1, kind: input, shape index: {}]
  %s2 = inlined_call_operand.hbm [shape: bf16[2048,128], index: 2, kind: input, shape index: {}]
  %s3 = inlined_call_operand.vmem [shape: f32[1,128], index: 3, kind: input, shape index: {}]
  %s4 = inlined_call_operand.hbm [shape: bf16[768,128], index: 4, kind: input, shape index: {}]
  %s5 = inlined_call_operand.vmem [shape: f32[1,128], index: 5, kind: input, shape index: {}]
  %s6 = inlined_call_operand.vmem [shape: s32[8,1], index: 6, kind: input, shape index: {}]
  %s7 = inlined_call_operand.hbm [shape: bf16[8,128], index: 7, kind: output, shape index: {0}]
  %s8 = inlined_call_operand.hbm [shape: bf16[8,128], index: 8, kind: output, shape index: {1}]
  %s9 = inlined_call_operand.hbm [shape: bf16[8,128], index: 9, kind: output, shape index: {2}]
  %s10 = inlined_call_operand.vmem [shape: f32[8,1], index: 10, kind: output, shape index: {3}]
  %11 = xla_tuple %s7, %s8, %s9, %s10
  %s12 = sld [smem:[#allocation0]]
  $region78: #{tpu_custom_call.1} parent=0
    _
  %s14 = ssub.s32 1, %s12
  %s15 = scalar_select 0, %s14, %s12
  $region1: #{tpu_custom_call.1} parent=0
    #allocation2 [shape = 'u8[32768]{0}', space=vmem, size = 0x8000, scoped, tag = 'input window, operand 0, single buffered']
    #allocation3 [shape = 's32[1]{0}', space=sflag, size = 0x4, scoped, tag = 'scoped memory for tpu_custom_call.1']
    #allocation4 [shape = 's32[1]{0}', space=sflag, size = 0x4, scoped, tag = 'scoped memory for tpu_custom_call.1']
    #allocation5 [shape = 'u8[12288]{0}', space=vmem, size = 0x3000, scoped, tag = 'input window, operand 1, single buffered']
    #allocation6 [shape = 's32[1]{0}', space=sflag, size = 0x4, scoped, tag = 'scoped memory for tpu_custom_call.1']
    #allocation7 [shape = 'u8[524288]{0}', space=vmem, size = 0x80000, scoped, tag = 'input window, operand 2, single buffered']
    #allocation8 [shape = 'u8[196608]{0}', space=vmem, size = 0x30000, scoped, tag = 'input window, operand 4, single buffered']
    #allocation9 [shape = 's32[1]{0}', space=sflag, size = 0x4, scoped, tag = 'scoped memory for tpu_custom_call.1']
    #allocation10 [shape = 'u8[2048]{0}', space=vmem, size = 0x800, scoped, tag = 'output window, operand 0, single buffered']
    #allocation11 [shape = 'u8[2048]{0}', space=vmem, size = 0x800, scoped, tag = 'output window, operand 1, single buffered']
    #allocation12 [shape = 's32[1]{0}', space=sflag, size = 0x4, scoped, tag = 'scoped memory for tpu_custom_call.1']
    #allocation13 [shape = 'u8[2048]{0}', space=vmem, size = 0x800, scoped, tag = 'output window, operand 2, single buffered']
    %16 = vsyncpa [#allocation3], 0
    %17 = vsyncpa [#allocation6], 0
    %18 = vsyncpa [#allocation9], 0
    %19 = vsyncpa [#allocation4], 0
    %20 = vsyncpa [#allocation12], 0
    // Predicated region
    $region2: #{tpu_custom_call.1} parent=1 // pred_check
      _
    $region3: #{tpu_custom_call.1} parent=1 // pred_check_branch
      %22 = sbr.rel (0) target = $region5
    $region4: #{tpu_custom_call.1} parent=1 // pred_region
      %s24 = ssub.s32 1024, 1024
      %25 = vsyncadd [#allocation3], %s24
      %s27 = sshll.u32 [#allocation2], 4
      %s28 = int_to_ptr.vmem [resolvable:$true] %s27
      %30 = dma.hbm_to_vmem [thread:$0]  %s0, 1024, %s28, [#allocation3]
    $region5: #{tpu_custom_call.1} parent=1 // pred_fallthru
      _
    // Predicated region
    $region6: #{tpu_custom_call.1} parent=1 // pred_check
      _
    $region7: #{tpu_custom_call.1} parent=1 // pred_check_branch
      %32 = sbr.rel (0) target = $region9
    $region8: #{tpu_custom_call.1} parent=1 // pred_region
      %s34 = ssub.s32 384, 384
      %35 = vsyncadd [#allocation6], %s34
      %s37 = sshll.u32 [#allocation5], 4
      %s38 = int_to_ptr.vmem [resolvable:$true] %s37
      %40 = dma.hbm_to_vmem [thread:$0]  %s1, 384, %s38, [#allocation6]
    $region9: #{tpu_custom_call.1} parent=1 // pred_fallthru
      _
    // Predicated region
    $region10: #{tpu_custom_call.1} parent=1 // pred_check
      _
    $region11: #{tpu_custom_call.1} parent=1 // pred_check_branch
      %42 = sbr.rel (0) target = $region13
    $region12: #{tpu_custom_call.1} parent=1 // pred_region
      %s44 = ssub.s32 16384, 16384
      %45 = vsyncadd [#allocation6], %s44
      %s46 = sshll.u32 [#allocation7], 4
      %s47 = int_to_ptr.vmem [resolvable:$true] %s46
      %52 = dma.hbm_to_vmem [thread:$0]  %s2, 16384, %s47, [#allocation6], 64, 64, 4
    $region13: #{tpu_custom_call.1} parent=1 // pred_fallthru
      _
    // Predicated region
    $region14: #{tpu_custom_call.1} parent=1 // pred_check
      _
    $region15: #{tpu_custom_call.1} parent=1 // pred_check_branch
      %54 = sbr.rel (0) target = $region17
    $region16: #{tpu_custom_call.1} parent=1 // pred_region
      _
    $region17: #{tpu_custom_call.1} parent=1 // pred_fallthru
      _
    // Predicated region
    $region18: #{tpu_custom_call.1} parent=1 // pred_check
      _
    $region19: #{tpu_custom_call.1} parent=1 // pred_check_branch
      %56 = sbr.rel (0) target = $region21
    $region20: #{tpu_custom_call.1} parent=1 // pred_region
      %s58 = ssub.s32 6144, 6144
      %59 = vsyncadd [#allocation9], %s58
      %s60 = sshll.u32 [#allocation8], 4
      %s61 = int_to_ptr.vmem [resolvable:$true] %s60
      %66 = dma.hbm_to_vmem [thread:$0]  %s4, 6144, %s61, [#allocation9], 64, 64, 4
    $region21: #{tpu_custom_call.1} parent=1 // pred_fallthru
      _
    // Predicated region
    $region22: #{tpu_custom_call.1} parent=1 // pred_check
      _
    $region23: #{tpu_custom_call.1} parent=1 // pred_check_branch
      %68 = sbr.rel (0) target = $region25
    $region24: #{tpu_custom_call.1} parent=1 // pred_region
      _
    $region25: #{tpu_custom_call.1} parent=1 // pred_fallthru
      _
    // Predicated region
    $region26: #{tpu_custom_call.1} parent=1 // pred_check
      _
    $region27: #{tpu_custom_call.1} parent=1 // pred_check_branch
      %70 = sbr.rel (0) target = $region29
    $region28: #{tpu_custom_call.1} parent=1 // pred_region
      _
    $region29: #{tpu_custom_call.1} parent=1 // pred_fallthru
      _
    // Predicated region
    $region30: #{tpu_custom_call.1} parent=1 // pred_check
      _
    $region31: #{tpu_custom_call.1} parent=1 // pred_check_branch
      %72 = sbr.rel (0) target = $region33
    $region32: #{tpu_custom_call.1} parent=1 // pred_region
      %73 = dma.done [#allocation3], 1024
    $region33: #{tpu_custom_call.1} parent=1 // pred_fallthru
      _
    // Predicated region
    $region34: #{tpu_custom_call.1} parent=1 // pred_check
      _
    $region35: #{tpu_custom_call.1} parent=1 // pred_check_branch
      %75 = sbr.rel (0) target = $region37
    $region36: #{tpu_custom_call.1} parent=1 // pred_region
      %76 = dma.done [#allocation6], 384
    $region37: #{tpu_custom_call.1} parent=1 // pred_fallthru
      _
    // Predicated region
    $region38: #{tpu_custom_call.1} parent=1 // pred_check
      _
    $region39: #{tpu_custom_call.1} parent=1 // pred_check_branch
      %78 = sbr.rel (0) target = $region41
    $region40: #{tpu_custom_call.1} parent=1 // pred_region
      %79 = dma.done [#allocation6], 16384
    $region41: #{tpu_custom_call.1} parent=1 // pred_fallthru
      _
    // Predicated region
    $region42: #{tpu_custom_call.1} parent=1 // pred_check
      _
    $region43: #{tpu_custom_call.1} parent=1 // pred_check_branch
      %81 = sbr.rel (0) target = $region45
    $region44: #{tpu_custom_call.1} parent=1 // pred_region
      %82 = dma.done [#allocation9], 6144
    $region45: #{tpu_custom_call.1} parent=1 // pred_fallthru
      _
    %v84 = vld [vmem:[#allocation2] sm:$0xff]
    %v85 = vld [vmem:[#allocation2 + $0x8] sm:$0xff]
    %v86 = vld [vmem:[#allocation2 + $0x10] sm:$0xff]
    %v87 = vld [vmem:[#allocation2 + $0x18] sm:$0xff]
    %v88 = vld [vmem:[#allocation2 + $0x20] sm:$0xff]
    %v89 = vld [vmem:[#allocation2 + $0x28] sm:$0xff]
    %v90 = vld [vmem:[#allocation2 + $0x30] sm:$0xff]
    %v91 = vld [vmem:[#allocation2 + $0x38] sm:$0xff]
    %v92 = vld [vmem:[#allocation7] sm:$0xf]
    %v93 = vld [vmem:[#allocation7 + $0x4] sm:$0xf]
    %v94 = vld [vmem:[#allocation7 + $0x8] sm:$0xf]
    %v95 = vld [vmem:[#allocation7 + $0xc] sm:$0xf]
    %v96 = vld [vmem:[#allocation7 + $0x10] sm:$0xf]
    %v97 = vld [vmem:[#allocation7 + $0x14] sm:$0xf]
    %v98 = vld [vmem:[#allocation7 + $0x18] sm:$0xf]
    %v99 = vld [vmem:[#allocation7 + $0x1c] sm:$0xf]
    %v100 = vld [vmem:[#allocation7 + $0x20] sm:$0xf]
    %v101 = vld [vmem:[#allocation7 + $0x24] sm:$0xf]
    %v102 = vld [vmem:[#allocation7 + $0x28] sm:$0xf]
    %v103 = vld [vmem:[#allocation7 + $0x2c] sm:$0xf]
    %v104 = vld [vmem:[#allocation7 + $0x30] sm:$0xf]
    %v105 = vld [vmem:[#allocation7 + $0x34] sm:$0xf]
    %v106 = vld [vmem:[#allocation7 + $0x38] sm:$0xf]
    %v107 = vld [vmem:[#allocation7 + $0x3c] sm:$0xf]
    %v108 = vld [vmem:[#allocation7 + $0x40] sm:$0xf]
    %v109 = vld [vmem:[#allocation7 + $0x44] sm:$0xf]
    %v110 = vld [vmem:[#allocation7 + $0x48] sm:$0xf]
    %v111 = vld [vmem:[#allocation7 + $0x4c] sm:$0xf]
    %v112 = vld [vmem:[#allocation7 + $0x50] sm:$0xf]
    %v113 = vld [vmem:[#allocation7 + $0x54] sm:$0xf]
    %v114 = vld [vmem:[#allocation7 + $0x58] sm:$0xf]
    %v115 = vld [vmem:[#allocation7 + $0x5c] sm:$0xf]
    %v116 = vld [vmem:[#allocation7 + $0x60] sm:$0xf]
    %v117 = vld [vmem:[#allocation7 + $0x64] sm:$0xf]
    %v118 = vld [vmem:[#allocation7 + $0x68] sm:$0xf]
    %v119 = vld [vmem:[#allocation7 + $0x6c] sm:$0xf]
    %v120 = vld [vmem:[#allocation7 + $0x70] sm:$0xf]
    %v121 = vld [vmem:[#allocation7 + $0x74] sm:$0xf]
    %v122 = vld [vmem:[#allocation7 + $0x78] sm:$0xf]
    %v123 = vld [vmem:[#allocation7 + $0x7c] sm:$0xf]
    %v124 = vld [vmem:[#allocation7 + $0x80] sm:$0xf]
    %v125 = vld [vmem:[#allocation7 + $0x84] sm:$0xf]
    %v126 = vld [vmem:[#allocation7 + $0x88] sm:$0xf]
    %v127 = vld [vmem:[#allocation7 + $0x8c] sm:$0xf]
    %v128 = vld [vmem:[#allocation7 + $0x90] sm:$0xf]
    %v129 = vld [vmem:[#allocation7 + $0x94] sm:$0xf]
    %v130 = vld [vmem:[#allocation7 + $0x98] sm:$0xf]
    %v131 = vld [vmem:[#allocation7 + $0x9c] sm:$0xf]
    %v132 = vld [vmem:[#allocation7 + $0xa0] sm:$0xf]
    %v133 = vld [vmem:[#allocation7 + $0xa4] sm:$0xf]
    %v134 = vld [vmem:[#allocation7 + $0xa8] sm:$0xf]
    %v135 = vld [vmem:[#allocation7 + $0xac] sm:$0xf]
    %v136 = vld [vmem:[#allocation7 + $0xb0] sm:$0xf]
    %v137 = vld [vmem:[#allocation7 + $0xb4] sm:$0xf]
    %v138 = vld [vmem:[#allocation7 + $0xb8] sm:$0xf]
    %v139 = vld [vmem:[#allocation7 + $0xbc] sm:$0xf]
    %v140 = vld [vmem:[#allocation7 + $0xc0] sm:$0xf]
    %v141 = vld [vmem:[#allocation7 + $0xc4] sm:$0xf]
    %v142 = vld [vmem:[#allocation7 + $0xc8] sm:$0xf]
    %v143 = vld [vmem:[#allocation7 + $0xcc] sm:$0xf]
    %v144 = vld [vmem:[#allocation7 + $0xd0] sm:$0xf]
    %v145 = vld [vmem:[#allocation7 + $0xd4] sm:$0xf]
    %v146 = vld [vmem:[#allocation7 + $0xd8] sm:$0xf]
    %v147 = vld [vmem:[#allocation7 + $0xdc] sm:$0xf]
    %v148 = vld [vmem:[#allocation7 + $0xe0] sm:$0xf]
    %v149 = vld [vmem:[#allocation7 + $0xe4] sm:$0xf]
    %v150 = vld [vmem:[#allocation7 + $0xe8] sm:$0xf]
    %v151 = vld [vmem:[#allocation7 + $0xec] sm:$0xf]
    %v152 = vld [vmem:[#allocation7 + $0xf0] sm:$0xf]
    %v153 = vld [vmem:[#allocation7 + $0xf4] sm:$0xf]
    %v154 = vld [vmem:[#allocation7 + $0xf8] sm:$0xf]
    %v155 = vld [vmem:[#allocation7 + $0xfc] sm:$0xf]
    %v156 = vld [vmem:[#allocation7 + $0x100] sm:$0xf]
    %v157 = vld [vmem:[#allocation7 + $0x104] sm:$0xf]
    %v158 = vld [vmem:[#allocation7 + $0x108] sm:$0xf]
    %v159 = vld [vmem:[#allocation7 + $0x10c] sm:$0xf]
    %v160 = vld [vmem:[#allocation7 + $0x110] sm:$0xf]
    %v161 = vld [vmem:[#allocation7 + $0x114] sm:$0xf]
    %v162 = vld [vmem:[#allocation7 + $0x118] sm:$0xf]
    %v163 = vld [vmem:[#allocation7 + $0x11c] sm:$0xf]
    %v164 = vld [vmem:[#allocation7 + $0x120] sm:$0xf]
    %v165 = vld [vmem:[#allocation7 + $0x124] sm:$0xf]
    %v166 = vld [vmem:[#allocation7 + $0x128] sm:$0xf]
    %v167 = vld [vmem:[#allocation7 + $0x12c] sm:$0xf]
    %v168 = vld [vmem:[#allocation7 + $0x130] sm:$0xf]
    %v169 = vld [vmem:[#allocation7 + $0x134] sm:$0xf]
    %v170 = vld [vmem:[#allocation7 + $0x138] sm:$0xf]
    %v171 = vld [vmem:[#allocation7 + $0x13c] sm:$0xf]
    %v172 = vld [vmem:[#allocation7 + $0x140] sm:$0xf]
    %v173 = vld [vmem:[#allocation7 + $0x144] sm:$0xf]
    %v174 = vld [vmem:[#allocation7 + $0x148] sm:$0xf]
    %v175 = vld [vmem:[#allocation7 + $0x14c] sm:$0xf]
    %v176 = vld [vmem:[#allocation7 + $0x150] sm:$0xf]
    %v177 = vld [vmem:[#allocation7 + $0x154] sm:$0xf]
    %v178 = vld [vmem:[#allocation7 + $0x158] sm:$0xf]
    %v179 = vld [vmem:[#allocation7 + $0x15c] sm:$0xf]
    %v180 = vld [vmem:[#allocation7 + $0x160] sm:$0xf]
    %v181 = vld [vmem:[#allocation7 + $0x164] sm:$0xf]
    %v182 = vld [vmem:[#allocation7 + $0x168] sm:$0xf]
    %v183 = vld [vmem:[#allocation7 + $0x16c] sm:$0xf]
    %v184 = vld [vmem:[#allocation7 + $0x170] sm:$0xf]
    %v185 = vld [vmem:[#allocation7 + $0x174] sm:$0xf]
    %v186 = vld [vmem:[#allocation7 + $0x178] sm:$0xf]
    %v187 = vld [vmem:[#allocation7 + $0x17c] sm:$0xf]
    %v188 = vld [vmem:[#allocation7 + $0x180] sm:$0xf]
    %v189 = vld [vmem:[#allocation7 + $0x184] sm:$0xf]
    %v190 = vld [vmem:[#allocation7 + $0x188] sm:$0xf]
    %v191 = vld [vmem:[#allocation7 + $0x18c] sm:$0xf]
    %v192 = vld [vmem:[#allocation7 + $0x190] sm:$0xf]
    %v193 = vld [vmem:[#allocation7 + $0x194] sm:$0xf]
    %v194 = vld [vmem:[#allocation7 + $0x198] sm:$0xf]
    %v195 = vld [vmem:[#allocation7 + $0x19c] sm:$0xf]
    %v196 = vld [vmem:[#allocation7 + $0x1a0] sm:$0xf]
    %v197 = vld [vmem:[#allocation7 + $0x1a4] sm:$0xf]
    %v198 = vld [vmem:[#allocation7 + $0x1a8] sm:$0xf]
    %v199 = vld [vmem:[#allocation7 + $0x1ac] sm:$0xf]
    %v200 = vld [vmem:[#allocation7 + $0x1b0] sm:$0xf]
    %v201 = vld [vmem:[#allocation7 + $0x1b4] sm:$0xf]
    %v202 = vld [vmem:[#allocation7 + $0x1b8] sm:$0xf]
    %v203 = vld [vmem:[#allocation7 + $0x1bc] sm:$0xf]
    %v204 = vld [vmem:[#allocation7 + $0x1c0] sm:$0xf]
    %v205 = vld [vmem:[#allocation7 + $0x1c4] sm:$0xf]
    %v206 = vld [vmem:[#allocation7 + $0x1c8] sm:$0xf]
    %v207 = vld [vmem:[#allocation7 + $0x1cc] sm:$0xf]
    %v208 = vld [vmem:[#allocation7 + $0x1d0] sm:$0xf]
    %v209 = vld [vmem:[#allocation7 + $0x1d4] sm:$0xf]
    %v210 = vld [vmem:[#allocation7 + $0x1d8] sm:$0xf]
    %v211 = vld [vmem:[#allocation7 + $0x1dc] sm:$0xf]
    %v212 = vld [vmem:[#allocation7 + $0x1e0] sm:$0xf]
    %v213 = vld [vmem:[#allocation7 + $0x1e4] sm:$0xf]
    %v214 = vld [vmem:[#allocation7 + $0x1e8] sm:$0xf]
    %v215 = vld [vmem:[#allocation7 + $0x1ec] sm:$0xf]
    %v216 = vld [vmem:[#allocation7 + $0x1f0] sm:$0xf]
    %v217 = vld [vmem:[#allocation7 + $0x1f4] sm:$0xf]
    %v218 = vld [vmem:[#allocation7 + $0x1f8] sm:$0xf]
    %v219 = vld [vmem:[#allocation7 + $0x1fc] sm:$0xf]
    %v220 = vld [vmem:[#allocation7 + $0x200] sm:$0xf]
    %v221 = vld [vmem:[#allocation7 + $0x204] sm:$0xf]
    %v222 = vld [vmem:[#allocation7 + $0x208] sm:$0xf]
    %v223 = vld [vmem:[#allocation7 + $0x20c] sm:$0xf]
    %v224 = vld [vmem:[#allocation7 + $0x210] sm:$0xf]
    %v225 = vld [vmem:[#allocation7 + $0x214] sm:$0xf]
    %v226 = vld [vmem:[#allocation7 + $0x218] sm:$0xf]
    %v227 = vld [vmem:[#allocation7 + $0x21c] sm:$0xf]
    %v228 = vld [vmem:[#allocation7 + $0x220] sm:$0xf]
    %v229 = vld [vmem:[#allocation7 + $0x224] sm:$0xf]
    %v230 = vld [vmem:[#allocation7 + $0x228] sm:$0xf]
    %v231 = vld [vmem:[#allocation7 + $0x22c] sm:$0xf]
    %v232 = vld [vmem:[#allocation7 + $0x230] sm:$0xf]
    %v233 = vld [vmem:[#allocation7 + $0x234] sm:$0xf]
    %v234 = vld [vmem:[#allocation7 + $0x238] sm:$0xf]
    %v235 = vld [vmem:[#allocation7 + $0x23c] sm:$0xf]
    %v236 = vld [vmem:[#allocation7 + $0x240] sm:$0xf]
    %v237 = vld [vmem:[#allocation7 + $0x244] sm:$0xf]
    %v238 = vld [vmem:[#allocation7 + $0x248] sm:$0xf]
    %v239 = vld [vmem:[#allocation7 + $0x24c] sm:$0xf]
    %v240 = vld [vmem:[#allocation7 + $0x250] sm:$0xf]
    %v241 = vld [vmem:[#allocation7 + $0x254] sm:$0xf]
    %v242 = vld [vmem:[#allocation7 + $0x258] sm:$0xf]
    %v243 = vld [vmem:[#allocation7 + $0x25c] sm:$0xf]
    %v244 = vld [vmem:[#allocation7 + $0x260] sm:$0xf]
    %v245 = vld [vmem:[#allocation7 + $0x264] sm:$0xf]
    %v246 = vld [vmem:[#allocation7 + $0x268] sm:$0xf]
    %v247 = vld [vmem:[#allocation7 + $0x26c] sm:$0xf]
    %v248 = vld [vmem:[#allocation7 + $0x270] sm:$0xf]
    %v249 = vld [vmem:[#allocation7 + $0x274] sm:$0xf]
    %v250 = vld [vmem:[#allocation7 + $0x278] sm:$0xf]
    %v251 = vld [vmem:[#allocation7 + $0x27c] sm:$0xf]
    %v252 = vld [vmem:[#allocation7 + $0x280] sm:$0xf]
    %v253 = vld [vmem:[#allocation7 + $0x284] sm:$0xf]
    %v254 = vld [vmem:[#allocation7 + $0x288] sm:$0xf]
    %v255 = vld [vmem:[#allocation7 + $0x28c] sm:$0xf]
    %v256 = vld [vmem:[#allocation7 + $0x290] sm:$0xf]
    %v257 = vld [vmem:[#allocation7 + $0x294] sm:$0xf]
    %v258 = vld [vmem:[#allocation7 + $0x298] sm:$0xf]
    %v259 = vld [vmem:[#allocation7 + $0x29c] sm:$0xf]
    %v260 = vld [vmem:[#allocation7 + $0x2a0] sm:$0xf]
    %v261 = vld [vmem:[#allocation7 + $0x2a4] sm:$0xf]
    %v262 = vld [vmem:[#allocation7 + $0x2a8] sm:$0xf]
    %v263 = vld [vmem:[#allocation7 + $0x2ac] sm:$0xf]
    %v264 = vld [vmem:[#allocation7 + $0x2b0] sm:$0xf]
    %v265 = vld [vmem:[#allocation7 + $0x2b4] sm:$0xf]
    %v266 = vld [vmem:[#allocation7 + $0x2b8] sm:$0xf]
    %v267 = vld [vmem:[#allocation7 + $0x2bc] sm:$0xf]
    %v268 = vld [vmem:[#allocation7 + $0x2c0] sm:$0xf]
    %v269 = vld [vmem:[#allocation7 + $0x2c4] sm:$0xf]
    %v270 = vld [vmem:[#allocation7 + $0x2c8] sm:$0xf]
    %v271 = vld [vmem:[#allocation7 + $0x2cc] sm:$0xf]
    %v272 = vld [vmem:[#allocation7 + $0x2d0] sm:$0xf]
    %v273 = vld [vmem:[#allocation7 + $0x2d4] sm:$0xf]
    %v274 = vld [vmem:[#allocation7 + $0x2d8] sm:$0xf]
    %v275 = vld [vmem:[#allocation7 + $0x2dc] sm:$0xf]
    %v276 = vld [vmem:[#allocation7 + $0x2e0] sm:$0xf]
    %v277 = vld [vmem:[#allocation7 + $0x2e4] sm:$0xf]
    %v278 = vld [vmem:[#allocation7 + $0x2e8] sm:$0xf]
    %v279 = vld [vmem:[#allocation7 + $0x2ec] sm:$0xf]
    %v280 = vld [vmem:[#allocation7 + $0x2f0] sm:$0xf]
    %v281 = vld [vmem:[#allocation7 + $0x2f4] sm:$0xf]
    %v282 = vld [vmem:[#allocation7 + $0x2f8] sm:$0xf]
    %v283 = vld [vmem:[#allocation7 + $0x2fc] sm:$0xf]
    %v284 = vld [vmem:[#allocation7 + $0x300] sm:$0xf]
    %v285 = vld [vmem:[#allocation7 + $0x304] sm:$0xf]
    %v286 = vld [vmem:[#allocation7 + $0x308] sm:$0xf]
    %v287 = vld [vmem:[#allocation7 + $0x30c] sm:$0xf]
    %v288 = vld [vmem:[#allocation7 + $0x310] sm:$0xf]
    %v289 = vld [vmem:[#allocation7 + $0x314] sm:$0xf]
    %v290 = vld [vmem:[#allocation7 + $0x318] sm:$0xf]
    %v291 = vld [vmem:[#allocation7 + $0x31c] sm:$0xf]
    %v292 = vld [vmem:[#allocation7 + $0x320] sm:$0xf]
    %v293 = vld [vmem:[#allocation7 + $0x324] sm:$0xf]
    %v294 = vld [vmem:[#allocation7 + $0x328] sm:$0xf]
    %v295 = vld [vmem:[#allocation7 + $0x32c] sm:$0xf]
    %v296 = vld [vmem:[#allocation7 + $0x330] sm:$0xf]
    %v297 = vld [vmem:[#allocation7 + $0x334] sm:$0xf]
    %v298 = vld [vmem:[#allocation7 + $0x338] sm:$0xf]
    %v299 = vld [vmem:[#allocation7 + $0x33c] sm:$0xf]
    %v300 = vld [vmem:[#allocation7 + $0x340] sm:$0xf]
    %v301 = vld [vmem:[#allocation7 + $0x344] sm:$0xf]
    %v302 = vld [vmem:[#allocation7 + $0x348] sm:$0xf]
    %v303 = vld [vmem:[#allocation7 + $0x34c] sm:$0xf]
    %v304 = vld [vmem:[#allocation7 + $0x350] sm:$0xf]
    %v305 = vld [vmem:[#allocation7 + $0x354] sm:$0xf]
    %v306 = vld [vmem:[#allocation7 + $0x358] sm:$0xf]
    %v307 = vld [vmem:[#allocation7 + $0x35c] sm:$0xf]
    %v308 = vld [vmem:[#allocation7 + $0x360] sm:$0xf]
    %v309 = vld [vmem:[#allocation7 + $0x364] sm:$0xf]
    %v310 = vld [vmem:[#allocation7 + $0x368] sm:$0xf]
    %v311 = vld [vmem:[#allocation7 + $0x36c] sm:$0xf]
    %v312 = vld [vmem:[#allocation7 + $0x370] sm:$0xf]
    %v313 = vld [vmem:[#allocation7 + $0x374] sm:$0xf]
    %v314 = vld [vmem:[#allocation7 + $0x378] sm:$0xf]
    %v315 = vld [vmem:[#allocation7 + $0x37c] sm:$0xf]
    %v316 = vld [vmem:[#allocation7 + $0x380] sm:$0xf]
    %v317 = vld [vmem:[#allocation7 + $0x384] sm:$0xf]
    %v318 = vld [vmem:[#allocation7 + $0x388] sm:$0xf]
    %v319 = vld [vmem:[#allocation7 + $0x38c] sm:$0xf]
    %v320 = vld [vmem:[#allocation7 + $0x390] sm:$0xf]
    %v321 = vld [vmem:[#allocation7 + $0x394] sm:$0xf]
    %v322 = vld [vmem:[#allocation7 + $0x398] sm:$0xf]
    %v323 = vld [vmem:[#allocation7 + $0x39c] sm:$0xf]
    %v324 = vld [vmem:[#allocation7 + $0x3a0] sm:$0xf]
    %v325 = vld [vmem:[#allocation7 + $0x3a4] sm:$0xf]
    %v326 = vld [vmem:[#allocation7 + $0x3a8] sm:$0xf]
    %v327 = vld [vmem:[#allocation7 + $0x3ac] sm:$0xf]
    %v328 = vld [vmem:[#allocation7 + $0x3b0] sm:$0xf]
    %v329 = vld [vmem:[#allocation7 + $0x3b4] sm:$0xf]
    %v330 = vld [vmem:[#allocation7 + $0x3b8] sm:$0xf]
    %v331 = vld [vmem:[#allocation7 + $0x3bc] sm:$0xf]
    %v332 = vld [vmem:[#allocation7 + $0x3c0] sm:$0xf]
    %v333 = vld [vmem:[#allocation7 + $0x3c4] sm:$0xf]
    %v334 = vld [vmem:[#allocation7 + $0x3c8] sm:$0xf]
    %v335 = vld [vmem:[#allocation7 + $0x3cc] sm:$0xf]
    %v336 = vld [vmem:[#allocation7 + $0x3d0] sm:$0xf]
    %v337 = vld [vmem:[#allocation7 + $0x3d4] sm:$0xf]
    %v338 = vld [vmem:[#allocation7 + $0x3d8] sm:$0xf]
    %v339 = vld [vmem:[#allocation7 + $0x3dc] sm:$0xf]
    %v340 = vld [vmem:[#allocation7 + $0x3e0] sm:$0xf]
    %v341 = vld [vmem:[#allocation7 + $0x3e4] sm:$0xf]
    %v342 = vld [vmem:[#allocation7 + $0x3e8] sm:$0xf]
    %v343 = vld [vmem:[#allocation7 + $0x3ec] sm:$0xf]
    %v344 = vld [vmem:[#allocation7 + $0x3f0] sm:$0xf]
    %v345 = vld [vmem:[#allocation7 + $0x3f4] sm:$0xf]
    %v346 = vld [vmem:[#allocation7 + $0x3f8] sm:$0xf]
    %v347 = vld [vmem:[#allocation7 + $0x3fc] sm:$0xf]
    %v348 = vld [vmem:[%s3] sm:$0x1]
    %v350 = vlaneseq
    %v351 = vshrl.u32 %v350, 7
    %v352 = vsub.s32 0, %v351
    %v353 = vrot.slane %v348, %v352
    %v363 = vunpack.c.l.b16 %v84
    %v364 = vunpack.c.h.b16 %v84
    %v365 = vunpack.c.l.b16 %v85
    %v366 = vunpack.c.h.b16 %v85
    %v367 = vunpack.c.l.b16 %v86
    %v368 = vunpack.c.h.b16 %v86
    %v369 = vunpack.c.l.b16 %v87
    %v370 = vunpack.c.h.b16 %v87
    %v371 = vunpack.c.l.b16 %v88
    %v372 = vunpack.c.h.b16 %v88
    %v373 = vunpack.c.l.b16 %v89
    %v374 = vunpack.c.h.b16 %v89
    %v375 = vunpack.c.l.b16 %v90
    %v376 = vunpack.c.h.b16 %v90
    %v377 = vunpack.c.l.b16 %v91
    %v378 = vunpack.c.h.b16 %v91
    %v379 = vpack.c.b16 %v363, %v363
    %v380 = vpack.c.b16 %v364, %v364
    %v381 = vpack.c.b16 %v365, %v365
    %v382 = vpack.c.b16 %v366, %v366
    %v383 = vpack.c.b16 %v367, %v367
    %v384 = vpack.c.b16 %v368, %v368
    %v385 = vpack.c.b16 %v369, %v369
    %v386 = vpack.c.b16 %v370, %v370
    %v387 = vpack.c.b16 %v371, %v371
    %v388 = vpack.c.b16 %v372, %v372
    %v389 = vpack.c.b16 %v373, %v373
    %v390 = vpack.c.b16 %v374, %v374
    %v391 = vpack.c.b16 %v375, %v375
    %v392 = vpack.c.b16 %v376, %v376
    %v393 = vpack.c.b16 %v377, %v377
    %v394 = vpack.c.b16 %v378, %v378
    %v667 = vunpack.c.l.b16 %v92
    %v668 = vunpack.c.l.b16 %v93
    %v669 = vunpack.c.l.b16 %v94
    %v670 = vunpack.c.l.b16 %v95
    %v671 = vunpack.c.l.b16 %v96
    %v672 = vunpack.c.l.b16 %v97
    %v673 = vunpack.c.l.b16 %v98
    %v674 = vunpack.c.l.b16 %v99
    %v675 = vunpack.c.l.b16 %v100
    %v676 = vunpack.c.l.b16 %v101
    %v677 = vunpack.c.l.b16 %v102
    %v678 = vunpack.c.l.b16 %v103
    %v679 = vunpack.c.l.b16 %v104
    %v680 = vunpack.c.l.b16 %v105
    %v681 = vunpack.c.l.b16 %v106
    %v682 = vunpack.c.l.b16 %v107
    %v683 = vunpack.c.l.b16 %v108
    %v684 = vunpack.c.l.b16 %v109
    %v685 = vunpack.c.l.b16 %v110
    %v686 = vunpack.c.l.b16 %v111
    %v687 = vunpack.c.l.b16 %v112
    %v688 = vunpack.c.l.b16 %v113
    %v689 = vunpack.c.l.b16 %v114
    %v690 = vunpack.c.l.b16 %v115
    %v691 = vunpack.c.l.b16 %v116
    %v692 = vunpack.c.l.b16 %v117
    %v693 = vunpack.c.l.b16 %v118
    %v694 = vunpack.c.l.b16 %v119
    %v695 = vunpack.c.l.b16 %v120
    %v696 = vunpack.c.l.b16 %v121
    %v697 = vunpack.c.l.b16 %v122
    %v698 = vunpack.c.l.b16 %v123
    %v699 = vunpack.c.l.b16 %v124
    %v700 = vunpack.c.l.b16 %v125
    %v701 = vunpack.c.l.b16 %v126
    %v702 = vunpack.c.l.b16 %v127
    %v703 = vunpack.c.l.b16 %v128
    %v704 = vunpack.c.l.b16 %v129
    %v705 = vunpack.c.l.b16 %v130
    %v706 = vunpack.c.l.b16 %v131
    %v707 = vunpack.c.l.b16 %v132
    %v708 = vunpack.c.l.b16 %v133
    %v709 = vunpack.c.l.b16 %v134
    %v710 = vunpack.c.l.b16 %v135
    %v711 = vunpack.c.l.b16 %v136
    %v712 = vunpack.c.l.b16 %v137
    %v713 = vunpack.c.l.b16 %v138
    %v714 = vunpack.c.l.b16 %v139
    %v715 = vunpack.c.l.b16 %v140
    %v716 = vunpack.c.l.b16 %v141
    %v717 = vunpack.c.l.b16 %v142
    %v718 = vunpack.c.l.b16 %v143
    %v719 = vunpack.c.l.b16 %v144
    %v720 = vunpack.c.l.b16 %v145
    %v721 = vunpack.c.l.b16 %v146
    %v722 = vunpack.c.l.b16 %v147
    %v723 = vunpack.c.l.b16 %v148
    %v724 = vunpack.c.l.b16 %v149
    %v725 = vunpack.c.l.b16 %v150
    %v726 = vunpack.c.l.b16 %v151
    %v727 = vunpack.c.l.b16 %v152
    %v728 = vunpack.c.l.b16 %v153
    %v729 = vunpack.c.l.b16 %v154
    %v730 = vunpack.c.l.b16 %v155
    %v731 = vunpack.c.l.b16 %v156
    %v732 = vunpack.c.l.b16 %v157
    %v733 = vunpack.c.l.b16 %v158
    %v734 = vunpack.c.l.b16 %v159
    %v735 = vunpack.c.l.b16 %v160
    %v736 = vunpack.c.l.b16 %v161
    %v737 = vunpack.c.l.b16 %v162
    %v738 = vunpack.c.l.b16 %v163
    %v739 = vunpack.c.l.b16 %v164
    %v740 = vunpack.c.l.b16 %v165
    %v741 = vunpack.c.l.b16 %v166
    %v742 = vunpack.c.l.b16 %v167
    %v743 = vunpack.c.l.b16 %v168
    %v744 = vunpack.c.l.b16 %v169
    %v745 = vunpack.c.l.b16 %v170
    %v746 = vunpack.c.l.b16 %v171
    %v747 = vunpack.c.l.b16 %v172
    %v748 = vunpack.c.l.b16 %v173
    %v749 = vunpack.c.l.b16 %v174
    %v750 = vunpack.c.l.b16 %v175
    %v751 = vunpack.c.l.b16 %v176
    %v752 = vunpack.c.l.b16 %v177
    %v753 = vunpack.c.l.b16 %v178
    %v754 = vunpack.c.l.b16 %v179
    %v755 = vunpack.c.l.b16 %v180
    %v756 = vunpack.c.l.b16 %v181
    %v757 = vunpack.c.l.b16 %v182
    %v758 = vunpack.c.l.b16 %v183
    %v759 = vunpack.c.l.b16 %v184
    %v760 = vunpack.c.l.b16 %v185
    %v761 = vunpack.c.l.b16 %v186
    %v762 = vunpack.c.l.b16 %v187
    %v763 = vunpack.c.l.b16 %v188
    %v764 = vunpack.c.l.b16 %v189
    %v765 = vunpack.c.l.b16 %v190
    %v766 = vunpack.c.l.b16 %v191
    %v767 = vunpack.c.l.b16 %v192
    %v768 = vunpack.c.l.b16 %v193
    %v769 = vunpack.c.l.b16 %v194
    %v770 = vunpack.c.l.b16 %v195
    %v771 = vunpack.c.l.b16 %v196
    %v772 = vunpack.c.l.b16 %v197
    %v773 = vunpack.c.l.b16 %v198
    %v774 = vunpack.c.l.b16 %v199
    %v775 = vunpack.c.l.b16 %v200
    %v776 = vunpack.c.l.b16 %v201
    %v777 = vunpack.c.l.b16 %v202
    %v778 = vunpack.c.l.b16 %v203
    %v779 = vunpack.c.l.b16 %v204
    %v780 = vunpack.c.l.b16 %v205
    %v781 = vunpack.c.l.b16 %v206
    %v782 = vunpack.c.l.b16 %v207
    %v783 = vunpack.c.l.b16 %v208
    %v784 = vunpack.c.l.b16 %v209
    %v785 = vunpack.c.l.b16 %v210
    %v786 = vunpack.c.l.b16 %v211
    %v787 = vunpack.c.l.b16 %v212
    %v788 = vunpack.c.l.b16 %v213
    %v789 = vunpack.c.l.b16 %v214
    %v790 = vunpack.c.l.b16 %v215
    %v791 = vunpack.c.l.b16 %v216
    %v792 = vunpack.c.l.b16 %v217
    %v793 = vunpack.c.l.b16 %v218
    %v794 = vunpack.c.l.b16 %v219
    %v795 = vunpack.c.l.b16 %v220
    %v796 = vunpack.c.l.b16 %v221
    %v797 = vunpack.c.l.b16 %v222
    %v798 = vunpack.c.l.b16 %v223
    %v799 = vunpack.c.l.b16 %v224
    %v800 = vunpack.c.l.b16 %v225
    %v801 = vunpack.c.l.b16 %v226
    %v802 = vunpack.c.l.b16 %v227
    %v803 = vunpack.c.l.b16 %v228
    %v804 = vunpack.c.l.b16 %v229
    %v805 = vunpack.c.l.b16 %v230
    %v806 = vunpack.c.l.b16 %v231
    %v807 = vunpack.c.l.b16 %v232
    %v808 = vunpack.c.l.b16 %v233
    %v809 = vunpack.c.l.b16 %v234
    %v810 = vunpack.c.l.b16 %v235
    %v811 = vunpack.c.l.b16 %v236
    %v812 = vunpack.c.l.b16 %v237
    %v813 = vunpack.c.l.b16 %v238
    %v814 = vunpack.c.l.b16 %v239
    %v815 = vunpack.c.l.b16 %v240
    %v816 = vunpack.c.l.b16 %v241
    %v817 = vunpack.c.l.b16 %v242
    %v818 = vunpack.c.l.b16 %v243
    %v819 = vunpack.c.l.b16 %v244
    %v820 = vunpack.c.l.b16 %v245
    %v821 = vunpack.c.l.b16 %v246
    %v822 = vunpack.c.l.b16 %v247
    %v823 = vunpack.c.l.b16 %v248
    %v824 = vunpack.c.l.b16 %v249
    %v825 = vunpack.c.l.b16 %v250
    %v826 = vunpack.c.l.b16 %v251
    %v827 = vunpack.c.l.b16 %v252
    %v828 = vunpack.c.l.b16 %v253
    %v829 = vunpack.c.l.b16 %v254
    %v830 = vunpack.c.l.b16 %v255
    %v831 = vunpack.c.l.b16 %v256
    %v832 = vunpack.c.l.b16 %v257
    %v833 = vunpack.c.l.b16 %v258
    %v834 = vunpack.c.l.b16 %v259
    %v835 = vunpack.c.l.b16 %v260
    %v836 = vunpack.c.l.b16 %v261
    %v837 = vunpack.c.l.b16 %v262
    %v838 = vunpack.c.l.b16 %v263
    %v839 = vunpack.c.l.b16 %v264
    %v840 = vunpack.c.l.b16 %v265
    %v841 = vunpack.c.l.b16 %v266
    %v842 = vunpack.c.l.b16 %v267
    %v843 = vunpack.c.l.b16 %v268
    %v844 = vunpack.c.l.b16 %v269
    %v845 = vunpack.c.l.b16 %v270
    %v846 = vunpack.c.l.b16 %v271
    %v847 = vunpack.c.l.b16 %v272
    %v848 = vunpack.c.l.b16 %v273
    %v849 = vunpack.c.l.b16 %v274
    %v850 = vunpack.c.l.b16 %v275
    %v851 = vunpack.c.l.b16 %v276
    %v852 = vunpack.c.l.b16 %v277
    %v853 = vunpack.c.l.b16 %v278
    %v854 = vunpack.c.l.b16 %v279
    %v855 = vunpack.c.l.b16 %v280
    %v856 = vunpack.c.l.b16 %v281
    %v857 = vunpack.c.l.b16 %v282
    %v858 = vunpack.c.l.b16 %v283
    %v859 = vunpack.c.l.b16 %v284
    %v860 = vunpack.c.l.b16 %v285
    %v861 = vunpack.c.l.b16 %v286
    %v862 = vunpack.c.l.b16 %v287
    %v863 = vunpack.c.l.b16 %v288
    %v864 = vunpack.c.l.b16 %v289
    %v865 = vunpack.c.l.b16 %v290
    %v866 = vunpack.c.l.b16 %v291
    %v867 = vunpack.c.l.b16 %v292
    %v868 = vunpack.c.l.b16 %v293
    %v869 = vunpack.c.l.b16 %v294
    %v870 = vunpack.c.l.b16 %v295
    %v871 = vunpack.c.l.b16 %v296
    %v872 = vunpack.c.l.b16 %v297
    %v873 = vunpack.c.l.b16 %v298
    %v874 = vunpack.c.l.b16 %v299
    %v875 = vunpack.c.l.b16 %v300
    %v876 = vunpack.c.l.b16 %v301
    %v877 = vunpack.c.l.b16 %v302
    %v878 = vunpack.c.l.b16 %v303
    %v879 = vunpack.c.l.b16 %v304
    %v880 = vunpack.c.l.b16 %v305
    %v881 = vunpack.c.l.b16 %v306
    %v882 = vunpack.c.l.b16 %v307
    %v883 = vunpack.c.l.b16 %v308
    %v884 = vunpack.c.l.b16 %v309
    %v885 = vunpack.c.l.b16 %v310
    %v886 = vunpack.c.l.b16 %v311
    %v887 = vunpack.c.l.b16 %v312
    %v888 = vunpack.c.l.b16 %v313
    %v889 = vunpack.c.l.b16 %v314
    %v890 = vunpack.c.l.b16 %v315
    %v891 = vunpack.c.l.b16 %v316
    %v892 = vunpack.c.l.b16 %v317
    %v893 = vunpack.c.l.b16 %v318
    %v894 = vunpack.c.l.b16 %v319
    %v895 = vunpack.c.l.b16 %v320
    %v896 = vunpack.c.l.b16 %v321
    %v897 = vunpack.c.l.b16 %v322
    %v898 = vunpack.c.l.b16 %v323
    %v899 = vunpack.c.l.b16 %v324
    %v900 = vunpack.c.l.b16 %v325
    %v901 = vunpack.c.l.b16 %v326
    %v902 = vunpack.c.l.b16 %v327
    %v903 = vunpack.c.l.b16 %v328
    %v904 = vunpack.c.l.b16 %v329
    %v905 = vunpack.c.l.b16 %v330
    %v906 = vunpack.c.l.b16 %v331
    %v907 = vunpack.c.l.b16 %v332
    %v908 = vunpack.c.l.b16 %v333
    %v909 = vunpack.c.l.b16 %v334
    %v910 = vunpack.c.l.b16 %v335
    %v911 = vunpack.c.l.b16 %v336
    %v912 = vunpack.c.l.b16 %v337
    %v913 = vunpack.c.l.b16 %v338
    %v914 = vunpack.c.l.b16 %v339
    %v915 = vunpack.c.l.b16 %v340
    %v916 = vunpack.c.l.b16 %v341
    %v917 = vunpack.c.l.b16 %v342
    %v918 = vunpack.c.l.b16 %v343
    %v919 = vunpack.c.l.b16 %v344
    %v920 = vunpack.c.l.b16 %v345
    %v921 = vunpack.c.l.b16 %v346
    %v922 = vunpack.c.l.b16 %v347
    %v923 = vpack.c.b16 %v668, %v667
    %v924 = vpack.c.b16 %v670, %v669
    %v925 = vpack.c.b16 %v672, %v671
    %v926 = vpack.c.b16 %v674, %v673
    %v927 = vpack.c.b16 %v676, %v675
    %v928 = vpack.c.b16 %v678, %v677
    %v929 = vpack.c.b16 %v680, %v679
    %v930 = vpack.c.b16 %v682, %v681
    %v931 = vpack.c.b16 %v684, %v683
    %v932 = vpack.c.b16 %v686, %v685
    %v933 = vpack.c.b16 %v688, %v687
    %v934 = vpack.c.b16 %v690, %v689
    %v935 = vpack.c.b16 %v692, %v691
    %v936 = vpack.c.b16 %v694, %v693
    %v937 = vpack.c.b16 %v696, %v695
    %v938 = vpack.c.b16 %v698, %v697
    %v939 = vpack.c.b16 %v700, %v699
    %v940 = vpack.c.b16 %v702, %v701
    %v941 = vpack.c.b16 %v704, %v703
    %v942 = vpack.c.b16 %v706, %v705
    %v943 = vpack.c.b16 %v708, %v707
    %v944 = vpack.c.b16 %v710, %v709
    %v945 = vpack.c.b16 %v712, %v711
    %v946 = vpack.c.b16 %v714, %v713
    %v947 = vpack.c.b16 %v716, %v715
    %v948 = vpack.c.b16 %v718, %v717
    %v949 = vpack.c.b16 %v720, %v719
    %v950 = vpack.c.b16 %v722, %v721
    %v951 = vpack.c.b16 %v724, %v723
    %v952 = vpack.c.b16 %v726, %v725
    %v953 = vpack.c.b16 %v728, %v727
    %v954 = vpack.c.b16 %v730, %v729
    %v955 = vpack.c.b16 %v732, %v731
    %v956 = vpack.c.b16 %v734, %v733
    %v957 = vpack.c.b16 %v736, %v735
    %v958 = vpack.c.b16 %v738, %v737
    %v959 = vpack.c.b16 %v740, %v739
    %v960 = vpack.c.b16 %v742, %v741
    %v961 = vpack.c.b16 %v744, %v743
    %v962 = vpack.c.b16 %v746, %v745
    %v963 = vpack.c.b16 %v748, %v747
    %v964 = vpack.c.b16 %v750, %v749
    %v965 = vpack.c.b16 %v752, %v751
    %v966 = vpack.c.b16 %v754, %v753
    %v967 = vpack.c.b16 %v756, %v755
    %v968 = vpack.c.b16 %v758, %v757
    %v969 = vpack.c.b16 %v760, %v759
    %v970 = vpack.c.b16 %v762, %v761
    %v971 = vpack.c.b16 %v764, %v763
    %v972 = vpack.c.b16 %v766, %v765
    %v973 = vpack.c.b16 %v768, %v767
    %v974 = vpack.c.b16 %v770, %v769
    %v975 = vpack.c.b16 %v772, %v771
    %v976 = vpack.c.b16 %v774, %v773
    %v977 = vpack.c.b16 %v776, %v775
    %v978 = vpack.c.b16 %v778, %v777
    %v979 = vpack.c.b16 %v780, %v779
    %v980 = vpack.c.b16 %v782, %v781
    %v981 = vpack.c.b16 %v784, %v783
    %v982 = vpack.c.b16 %v786, %v785
    %v983 = vpack.c.b16 %v788, %v787
    %v984 = vpack.c.b16 %v790, %v789
    %v985 = vpack.c.b16 %v792, %v791
    %v986 = vpack.c.b16 %v794, %v793
    %v987 = vpack.c.b16 %v796, %v795
    %v988 = vpack.c.b16 %v798, %v797
    %v989 = vpack.c.b16 %v800, %v799
    %v990 = vpack.c.b16 %v802, %v801
    %v991 = vpack.c.b16 %v804, %v803
    %v992 = vpack.c.b16 %v806, %v805
    %v993 = vpack.c.b16 %v808, %v807
    %v994 = vpack.c.b16 %v810, %v809
    %v995 = vpack.c.b16 %v812, %v811
    %v996 = vpack.c.b16 %v814, %v813
    %v997 = vpack.c.b16 %v816, %v815
    %v998 = vpack.c.b16 %v818, %v817
    %v999 = vpack.c.b16 %v820, %v819
    %v1000 = vpack.c.b16 %v822, %v821
    %v1001 = vpack.c.b16 %v824, %v823
    %v1002 = vpack.c.b16 %v826, %v825
    %v1003 = vpack.c.b16 %v828, %v827
    %v1004 = vpack.c.b16 %v830, %v829
    %v1005 = vpack.c.b16 %v832, %v831
    %v1006 = vpack.c.b16 %v834, %v833
    %v1007 = vpack.c.b16 %v836, %v835
    %v1008 = vpack.c.b16 %v838, %v837
    %v1009 = vpack.c.b16 %v840, %v839
    %v1010 = vpack.c.b16 %v842, %v841
    %v1011 = vpack.c.b16 %v844, %v843
    %v1012 = vpack.c.b16 %v846, %v845
    %v1013 = vpack.c.b16 %v848, %v847
    %v1014 = vpack.c.b16 %v850, %v849
    %v1015 = vpack.c.b16 %v852, %v851
    %v1016 = vpack.c.b16 %v854, %v853
    %v1017 = vpack.c.b16 %v856, %v855
    %v1018 = vpack.c.b16 %v858, %v857
    %v1019 = vpack.c.b16 %v860, %v859
    %v1020 = vpack.c.b16 %v862, %v861
    %v1021 = vpack.c.b16 %v864, %v863
    %v1022 = vpack.c.b16 %v866, %v865
    %v1023 = vpack.c.b16 %v868, %v867
    %v1024 = vpack.c.b16 %v870, %v869
    %v1025 = vpack.c.b16 %v872, %v871
    %v1026 = vpack.c.b16 %v874, %v873
    %v1027 = vpack.c.b16 %v876, %v875
    %v1028 = vpack.c.b16 %v878, %v877
    %v1029 = vpack.c.b16 %v880, %v879
    %v1030 = vpack.c.b16 %v882, %v881
    %v1031 = vpack.c.b16 %v884, %v883
    %v1032 = vpack.c.b16 %v886, %v885
    %v1033 = vpack.c.b16 %v888, %v887
    %v1034 = vpack.c.b16 %v890, %v889
    %v1035 = vpack.c.b16 %v892, %v891
    %v1036 = vpack.c.b16 %v894, %v893
    %v1037 = vpack.c.b16 %v896, %v895
    %v1038 = vpack.c.b16 %v898, %v897
    %v1039 = vpack.c.b16 %v900, %v899
    %v1040 = vpack.c.b16 %v902, %v901
    %v1041 = vpack.c.b16 %v904, %v903
    %v1042 = vpack.c.b16 %v906, %v905
    %v1043 = vpack.c.b16 %v908, %v907
    %v1044 = vpack.c.b16 %v910, %v909
    %v1045 = vpack.c.b16 %v912, %v911
    %v1046 = vpack.c.b16 %v914, %v913
    %v1047 = vpack.c.b16 %v916, %v915
    %v1048 = vpack.c.b16 %v918, %v917
    %v1049 = vpack.c.b16 %v920, %v919
    %v1050 = vpack.c.b16 %v922, %v921
    %1179 = vmatprep.subr.bf16.mxu0 0
    %1180 = vmatpush1.bf16.msra.mxu0 %v923
    %1181 = vmatprep.subr.bf16.mxu0 0
    %1182 = vmatpush1.bf16.msra.mxu0 %v924
    %1183 = vmatprep.subr.bf16.mxu0 0
    %1184 = vmatpush1.bf16.msra.mxu0 %v925
    %1185 = vmatprep.subr.bf16.mxu0 0
    %1186 = vmatpush1.bf16.msra.mxu0 %v926
    %1187 = vmatprep.subr.bf16.mxu0 0
    %1188 = vmatpush1.bf16.msra.mxu0 %v927
    %1189 = vmatprep.subr.bf16.mxu0 0
    %1190 = vmatpush1.bf16.msra.mxu0 %v928
    %1191 = vmatprep.subr.bf16.mxu0 0
    %1192 = vmatpush1.bf16.msra.mxu0 %v929
    %1193 = vmatprep.subr.bf16.mxu0 0
    %1194 = vmatpush1.bf16.msra.mxu0 %v930
    %1195 = vmatprep.subr.bf16.mxu0 0
    %1196 = vmatpush1.bf16.msra.mxu0 %v931
    %1197 = vmatprep.subr.bf16.mxu0 0
    %1198 = vmatpush1.bf16.msra.mxu0 %v932
    %1199 = vmatprep.subr.bf16.mxu0 0
    %1200 = vmatpush1.bf16.msra.mxu0 %v933
    %1201 = vmatprep.subr.bf16.mxu0 0
    %1202 = vmatpush1.bf16.msra.mxu0 %v934
    %1203 = vmatprep.subr.bf16.mxu0 0
    %1204 = vmatpush1.bf16.msra.mxu0 %v935
    %1205 = vmatprep.subr.bf16.mxu0 0
    %1206 = vmatpush1.bf16.msra.mxu0 %v936
    %1207 = vmatprep.subr.bf16.mxu0 0
    %1208 = vmatpush1.bf16.msra.mxu0 %v937
    %1209 = vmatprep.subr.bf16.mxu0 0
    %1210 = vmatpush1.bf16.msra.mxu0 %v938
    %1211 = vmatprep.mubr.bf16.mxu0 %v380
    %1212 = vmatmul.mubr.bf16.gmra.mrb[0].mxu0 %v379
    %v1213 = vpop.f32.mrb[0].mxu0
    %v1214 = vadd.f32 %v353, %v1213
    %v1215 = vpop.f32.mrb[0].mxu0
    %v1216 = vpop.f32.mrb[0].mxu0
    %v1217 = vpop.f32.mrb[0].mxu0
    %1218 = vdwg.mxu0
    %1219 = vmatprep.subr.bf16.mxu0 0
    %1220 = vmatpush1.bf16.msra.mxu0 %v939
    %1221 = vmatprep.subr.bf16.mxu0 0
    %1222 = vmatpush1.bf16.msra.mxu0 %v940
    %1223 = vmatprep.subr.bf16.mxu0 0
    %1224 = vmatpush1.bf16.msra.mxu0 %v941
    %1225 = vmatprep.subr.bf16.mxu0 0
    %1226 = vmatpush1.bf16.msra.mxu0 %v942
    %1227 = vmatprep.subr.bf16.mxu0 0
    %1228 = vmatpush1.bf16.msra.mxu0 %v943
    %1229 = vmatprep.subr.bf16.mxu0 0
    %1230 = vmatpush1.bf16.msra.mxu0 %v944
    %1231 = vmatprep.subr.bf16.mxu0 0
    %1232 = vmatpush1.bf16.msra.mxu0 %v945
    %1233 = vmatprep.subr.bf16.mxu0 0
    %1234 = vmatpush1.bf16.msra.mxu0 %v946
    %1235 = vmatprep.subr.bf16.mxu0 0
    %1236 = vmatpush1.bf16.msra.mxu0 %v947
    %1237 = vmatprep.subr.bf16.mxu0 0
    %1238 = vmatpush1.bf16.msra.mxu0 %v948
    %1239 = vmatprep.subr.bf16.mxu0 0
    %1240 = vmatpush1.bf16.msra.mxu0 %v949
    %1241 = vmatprep.subr.bf16.mxu0 0
    %1242 = vmatpush1.bf16.msra.mxu0 %v950
    %1243 = vmatprep.subr.bf16.mxu0 0
    %1244 = vmatpush1.bf16.msra.mxu0 %v951
    %1245 = vmatprep.subr.bf16.mxu0 0
    %1246 = vmatpush1.bf16.msra.mxu0 %v952
    %1247 = vmatprep.subr.bf16.mxu0 0
    %1248 = vmatpush1.bf16.msra.mxu0 %v953
    %1249 = vmatprep.subr.bf16.mxu0 0
    %1250 = vmatpush1.bf16.msra.mxu0 %v954
    %1251 = vmatprep.mubr.bf16.mxu0 %v382
    %1252 = vmatmul.mubr.bf16.gmra.mrb[0].mxu0 %v381
    %v1253 = vpop.f32.mrb[0].mxu0
    %v1254 = vadd.f32 %v1214, %v1253
    %v1255 = vpop.f32.mrb[0].mxu0
    %v1256 = vpop.f32.mrb[0].mxu0
    %v1257 = vpop.f32.mrb[0].mxu0
    %1258 = vdwg.mxu0
    %1259 = vmatprep.subr.bf16.mxu0 0
    %1260 = vmatpush1.bf16.msra.mxu0 %v955
    %1261 = vmatprep.subr.bf16.mxu0 0
    %1262 = vmatpush1.bf16.msra.mxu0 %v956
    %1263 = vmatprep.subr.bf16.mxu0 0
    %1264 = vmatpush1.bf16.msra.mxu0 %v957
    %1265 = vmatprep.subr.bf16.mxu0 0
    %1266 = vmatpush1.bf16.msra.mxu0 %v958
    %1267 = vmatprep.subr.bf16.mxu0 0
    %1268 = vmatpush1.bf16.msra.mxu0 %v959
    %1269 = vmatprep.subr.bf16.mxu0 0
    %1270 = vmatpush1.bf16.msra.mxu0 %v960
    %1271 = vmatprep.subr.bf16.mxu0 0
    %1272 = vmatpush1.bf16.msra.mxu0 %v961
    %1273 = vmatprep.subr.bf16.mxu0 0
    %1274 = vmatpush1.bf16.msra.mxu0 %v962
    %1275 = vmatprep.subr.bf16.mxu0 0
    %1276 = vmatpush1.bf16.msra.mxu0 %v963
    %1277 = vmatprep.subr.bf16.mxu0 0
    %1278 = vmatpush1.bf16.msra.mxu0 %v964
    %1279 = vmatprep.subr.bf16.mxu0 0
    %1280 = vmatpush1.bf16.msra.mxu0 %v965
    %1281 = vmatprep.subr.bf16.mxu0 0
    %1282 = vmatpush1.bf16.msra.mxu0 %v966
    %1283 = vmatprep.subr.bf16.mxu0 0
    %1284 = vmatpush1.bf16.msra.mxu0 %v967
    %1285 = vmatprep.subr.bf16.mxu0 0
    %1286 = vmatpush1.bf16.msra.mxu0 %v968
    %1287 = vmatprep.subr.bf16.mxu0 0
    %1288 = vmatpush1.bf16.msra.mxu0 %v969
    %1289 = vmatprep.subr.bf16.mxu0 0
    %1290 = vmatpush1.bf16.msra.mxu0 %v970
    %1291 = vmatprep.mubr.bf16.mxu0 %v384
    %1292 = vmatmul.mubr.bf16.gmra.mrb[0].mxu0 %v383
    %v1293 = vpop.f32.mrb[0].mxu0
    %v1294 = vadd.f32 %v1254, %v1293
    %v1295 = vpop.f32.mrb[0].mxu0
    %v1296 = vpop.f32.mrb[0].mxu0
    %v1297 = vpop.f32.mrb[0].mxu0
    %1298 = vdwg.mxu0
    %1299 = vmatprep.subr.bf16.mxu0 0
    %1300 = vmatpush1.bf16.msra.mxu0 %v971
    %1301 = vmatprep.subr.bf16.mxu0 0
    %1302 = vmatpush1.bf16.msra.mxu0 %v972
    %1303 = vmatprep.subr.bf16.mxu0 0
    %1304 = vmatpush1.bf16.msra.mxu0 %v973
    %1305 = vmatprep.subr.bf16.mxu0 0
    %1306 = vmatpush1.bf16.msra.mxu0 %v974
    %1307 = vmatprep.subr.bf16.mxu0 0
    %1308 = vmatpush1.bf16.msra.mxu0 %v975
    %1309 = vmatprep.subr.bf16.mxu0 0
    %1310 = vmatpush1.bf16.msra.mxu0 %v976
    %1311 = vmatprep.subr.bf16.mxu0 0
    %1312 = vmatpush1.bf16.msra.mxu0 %v977
    %1313 = vmatprep.subr.bf16.mxu0 0
    %1314 = vmatpush1.bf16.msra.mxu0 %v978
    %1315 = vmatprep.subr.bf16.mxu0 0
    %1316 = vmatpush1.bf16.msra.mxu0 %v979
    %1317 = vmatprep.subr.bf16.mxu0 0
    %1318 = vmatpush1.bf16.msra.mxu0 %v980
    %1319 = vmatprep.subr.bf16.mxu0 0
    %1320 = vmatpush1.bf16.msra.mxu0 %v981
    %1321 = vmatprep.subr.bf16.mxu0 0
    %1322 = vmatpush1.bf16.msra.mxu0 %v982
    %1323 = vmatprep.subr.bf16.mxu0 0
    %1324 = vmatpush1.bf16.msra.mxu0 %v983
    %1325 = vmatprep.subr.bf16.mxu0 0
    %1326 = vmatpush1.bf16.msra.mxu0 %v984
    %1327 = vmatprep.subr.bf16.mxu0 0
    %1328 = vmatpush1.bf16.msra.mxu0 %v985
    %1329 = vmatprep.subr.bf16.mxu0 0
    %1330 = vmatpush1.bf16.msra.mxu0 %v986
    %1331 = vmatprep.mubr.bf16.mxu0 %v386
    %1332 = vmatmul.mubr.bf16.gmra.mrb[0].mxu0 %v385
    %v1333 = vpop.f32.mrb[0].mxu0
    %v1334 = vadd.f32 %v1294, %v1333
    %v1335 = vpop.f32.mrb[0].mxu0
    %v1336 = vpop.f32.mrb[0].mxu0
    %v1337 = vpop.f32.mrb[0].mxu0
    %1338 = vdwg.mxu0
    %1339 = vmatprep.subr.bf16.mxu0 0
    %1340 = vmatpush1.bf16.msra.mxu0 %v987
    %1341 = vmatprep.subr.bf16.mxu0 0
    %1342 = vmatpush1.bf16.msra.mxu0 %v988
    %1343 = vmatprep.subr.bf16.mxu0 0
    %1344 = vmatpush1.bf16.msra.mxu0 %v989
    %1345 = vmatprep.subr.bf16.mxu0 0
    %1346 = vmatpush1.bf16.msra.mxu0 %v990
    %1347 = vmatprep.subr.bf16.mxu0 0
    %1348 = vmatpush1.bf16.msra.mxu0 %v991
    %1349 = vmatprep.subr.bf16.mxu0 0
    %1350 = vmatpush1.bf16.msra.mxu0 %v992
    %1351 = vmatprep.subr.bf16.mxu0 0
    %1352 = vmatpush1.bf16.msra.mxu0 %v993
    %1353 = vmatprep.subr.bf16.mxu0 0
    %1354 = vmatpush1.bf16.msra.mxu0 %v994
    %1355 = vmatprep.subr.bf16.mxu0 0
    %1356 = vmatpush1.bf16.msra.mxu0 %v995
    %1357 = vmatprep.subr.bf16.mxu0 0
    %1358 = vmatpush1.bf16.msra.mxu0 %v996
    %1359 = vmatprep.subr.bf16.mxu0 0
    %1360 = vmatpush1.bf16.msra.mxu0 %v997
    %1361 = vmatprep.subr.bf16.mxu0 0
    %1362 = vmatpush1.bf16.msra.mxu0 %v998
    %1363 = vmatprep.subr.bf16.mxu0 0
    %1364 = vmatpush1.bf16.msra.mxu0 %v999
    %1365 = vmatprep.subr.bf16.mxu0 0
    %1366 = vmatpush1.bf16.msra.mxu0 %v1000
    %1367 = vmatprep.subr.bf16.mxu0 0
    %1368 = vmatpush1.bf16.msra.mxu0 %v1001
    %1369 = vmatprep.subr.bf16.mxu0 0
    %1370 = vmatpush1.bf16.msra.mxu0 %v1002
    %1371 = vmatprep.mubr.bf16.mxu0 %v388
    %1372 = vmatmul.mubr.bf16.gmra.mrb[0].mxu0 %v387
    %v1373 = vpop.f32.mrb[0].mxu0
    %v1374 = vadd.f32 %v1334, %v1373
    %v1375 = vpop.f32.mrb[0].mxu0
    %v1376 = vpop.f32.mrb[0].mxu0
    %v1377 = vpop.f32.mrb[0].mxu0
    %1378 = vdwg.mxu0
    %1379 = vmatprep.subr.bf16.mxu0 0
    %1380 = vmatpush1.bf16.msra.mxu0 %v1003
    %1381 = vmatprep.subr.bf16.mxu0 0
    %1382 = vmatpush1.bf16.msra.mxu0 %v1004
    %1383 = vmatprep.subr.bf16.mxu0 0
    %1384 = vmatpush1.bf16.msra.mxu0 %v1005
    %1385 = vmatprep.subr.bf16.mxu0 0
    %1386 = vmatpush1.bf16.msra.mxu0 %v1006
    %1387 = vmatprep.subr.bf16.mxu0 0
    %1388 = vmatpush1.bf16.msra.mxu0 %v1007
    %1389 = vmatprep.subr.bf16.mxu0 0
    %1390 = vmatpush1.bf16.msra.mxu0 %v1008
    %1391 = vmatprep.subr.bf16.mxu0 0
    %1392 = vmatpush1.bf16.msra.mxu0 %v1009
    %1393 = vmatprep.subr.bf16.mxu0 0
    %1394 = vmatpush1.bf16.msra.mxu0 %v1010
    %1395 = vmatprep.subr.bf16.mxu0 0
    %1396 = vmatpush1.bf16.msra.mxu0 %v1011
    %1397 = vmatprep.subr.bf16.mxu0 0
    %1398 = vmatpush1.bf16.msra.mxu0 %v1012
    %1399 = vmatprep.subr.bf16.mxu0 0
    %1400 = vmatpush1.bf16.msra.mxu0 %v1013
    %1401 = vmatprep.subr.bf16.mxu0 0
    %1402 = vmatpush1.bf16.msra.mxu0 %v1014
    %1403 = vmatprep.subr.bf16.mxu0 0
    %1404 = vmatpush1.bf16.msra.mxu0 %v1015
    %1405 = vmatprep.subr.bf16.mxu0 0
    %1406 = vmatpush1.bf16.msra.mxu0 %v1016
    %1407 = vmatprep.subr.bf16.mxu0 0
    %1408 = vmatpush1.bf16.msra.mxu0 %v1017
    %1409 = vmatprep.subr.bf16.mxu0 0
    %1410 = vmatpush1.bf16.msra.mxu0 %v1018
    %1411 = vmatprep.mubr.bf16.mxu0 %v390
    %1412 = vmatmul.mubr.bf16.gmra.mrb[0].mxu0 %v389
    %v1413 = vpop.f32.mrb[0].mxu0
    %v1414 = vadd.f32 %v1374, %v1413
    %v1415 = vpop.f32.mrb[0].mxu0
    %v1416 = vpop.f32.mrb[0].mxu0
    %v1417 = vpop.f32.mrb[0].mxu0
    %1418 = vdwg.mxu0
    %1419 = vmatprep.subr.bf16.mxu0 0
    %1420 = vmatpush1.bf16.msra.mxu0 %v1019
    %1421 = vmatprep.subr.bf16.mxu0 0
    %1422 = vmatpush1.bf16.msra.mxu0 %v1020
    %1423 = vmatprep.subr.bf16.mxu0 0
    %1424 = vmatpush1.bf16.msra.mxu0 %v1021
    %1425 = vmatprep.subr.bf16.mxu0 0
    %1426 = vmatpush1.bf16.msra.mxu0 %v1022
    %1427 = vmatprep.subr.bf16.mxu0 0
    %1428 = vmatpush1.bf16.msra.mxu0 %v1023
    %1429 = vmatprep.subr.bf16.mxu0 0
    %1430 = vmatpush1.bf16.msra.mxu0 %v1024
    %1431 = vmatprep.subr.bf16.mxu0 0
    %1432 = vmatpush1.bf16.msra.mxu0 %v1025
    %1433 = vmatprep.subr.bf16.mxu0 0
    %1434 = vmatpush1.bf16.msra.mxu0 %v1026
    %1435 = vmatprep.subr.bf16.mxu0 0
    %1436 = vmatpush1.bf16.msra.mxu0 %v1027
    %1437 = vmatprep.subr.bf16.mxu0 0
    %1438 = vmatpush1.bf16.msra.mxu0 %v1028
    %1439 = vmatprep.subr.bf16.mxu0 0
    %1440 = vmatpush1.bf16.msra.mxu0 %v1029
    %1441 = vmatprep.subr.bf16.mxu0 0
    %1442 = vmatpush1.bf16.msra.mxu0 %v1030
    %1443 = vmatprep.subr.bf16.mxu0 0
    %1444 = vmatpush1.bf16.msra.mxu0 %v1031
    %1445 = vmatprep.subr.bf16.mxu0 0
    %1446 = vmatpush1.bf16.msra.mxu0 %v1032
    %1447 = vmatprep.subr.bf16.mxu0 0
    %1448 = vmatpush1.bf16.msra.mxu0 %v1033
    %1449 = vmatprep.subr.bf16.mxu0 0
    %1450 = vmatpush1.bf16.msra.mxu0 %v1034
    %1451 = vmatprep.mubr.bf16.mxu0 %v392
    %1452 = vmatmul.mubr.bf16.gmra.mrb[0].mxu0 %v391
    %v1453 = vpop.f32.mrb[0].mxu0
    %v1454 = vadd.f32 %v1414, %v1453
    %v1455 = vpop.f32.mrb[0].mxu0
    %v1456 = vpop.f32.mrb[0].mxu0
    %v1457 = vpop.f32.mrb[0].mxu0
    %1458 = vdwg.mxu0
    %1459 = vmatprep.subr.bf16.mxu0 0
    %1460 = vmatpush1.bf16.msra.mxu0 %v1035
    %1461 = vmatprep.subr.bf16.mxu0 0
    %1462 = vmatpush1.bf16.msra.mxu0 %v1036
    %1463 = vmatprep.subr.bf16.mxu0 0
    %1464 = vmatpush1.bf16.msra.mxu0 %v1037
    %1465 = vmatprep.subr.bf16.mxu0 0
    %1466 = vmatpush1.bf16.msra.mxu0 %v1038
    %1467 = vmatprep.subr.bf16.mxu0 0
    %1468 = vmatpush1.bf16.msra.mxu0 %v1039
    %1469 = vmatprep.subr.bf16.mxu0 0
    %1470 = vmatpush1.bf16.msra.mxu0 %v1040
    %1471 = vmatprep.subr.bf16.mxu0 0
    %1472 = vmatpush1.bf16.msra.mxu0 %v1041
    %1473 = vmatprep.subr.bf16.mxu0 0
    %1474 = vmatpush1.bf16.msra.mxu0 %v1042
    %1475 = vmatprep.subr.bf16.mxu0 0
    %1476 = vmatpush1.bf16.msra.mxu0 %v1043
    %1477 = vmatprep.subr.bf16.mxu0 0
    %1478 = vmatpush1.bf16.msra.mxu0 %v1044
    %1479 = vmatprep.subr.bf16.mxu0 0
    %1480 = vmatpush1.bf16.msra.mxu0 %v1045
    %1481 = vmatprep.subr.bf16.mxu0 0
    %1482 = vmatpush1.bf16.msra.mxu0 %v1046
    %1483 = vmatprep.subr.bf16.mxu0 0
    %1484 = vmatpush1.bf16.msra.mxu0 %v1047
    %1485 = vmatprep.subr.bf16.mxu0 0
    %1486 = vmatpush1.bf16.msra.mxu0 %v1048
    %1487 = vmatprep.subr.bf16.mxu0 0
    %1488 = vmatpush1.bf16.msra.mxu0 %v1049
    %1489 = vmatprep.subr.bf16.mxu0 0
    %1490 = vmatpush1.bf16.msra.mxu0 %v1050
    %1491 = vmatprep.mubr.bf16.mxu0 %v394
    %1492 = vmatmul.mubr.bf16.gmra.mrb[0].mxu0 %v393
    %v1493 = vpop.f32.mrb[0].mxu0
    %v1494 = vadd.f32 %v1454, %v1493
    %v1495 = vpop.f32.mrb[0].mxu0
    %v1496 = vpop.f32.mrb[0].mxu0
    %v1497 = vpop.f32.mrb[0].mxu0
    %1498 = vdwg.mxu0
    %v1499 = vld [vmem:[#allocation5] sm:$0xff]
    %v1500 = vld [vmem:[#allocation5 + $0x8] sm:$0xff]
    %v1501 = vld [vmem:[#allocation5 + $0x10] sm:$0xff]
    %v1502 = vld [vmem:[#allocation8] sm:$0xf]
    %v1503 = vld [vmem:[#allocation8 + $0x4] sm:$0xf]
    %v1504 = vld [vmem:[#allocation8 + $0x8] sm:$0xf]
    %v1505 = vld [vmem:[#allocation8 + $0xc] sm:$0xf]
    %v1506 = vld [vmem:[#allocation8 + $0x10] sm:$0xf]
    %v1507 = vld [vmem:[#allocation8 + $0x14] sm:$0xf]
    %v1508 = vld [vmem:[#allocation8 + $0x18] sm:$0xf]
    %v1509 = vld [vmem:[#allocation8 + $0x1c] sm:$0xf]
    %v1510 = vld [vmem:[#allocation8 + $0x20] sm:$0xf]
    %v1511 = vld [vmem:[#allocation8 + $0x24] sm:$0xf]
    %v1512 = vld [vmem:[#allocation8 + $0x28] sm:$0xf]
    %v1513 = vld [vmem:[#allocation8 + $0x2c] sm:$0xf]
    %v1514 = vld [vmem:[#allocation8 + $0x30] sm:$0xf]
    %v1515 = vld [vmem:[#allocation8 + $0x34] sm:$0xf]
    %v1516 = vld [vmem:[#allocation8 + $0x38] sm:$0xf]
    %v1517 = vld [vmem:[#allocation8 + $0x3c] sm:$0xf]
    %v1518 = vld [vmem:[#allocation8 + $0x40] sm:$0xf]
    %v1519 = vld [vmem:[#allocation8 + $0x44] sm:$0xf]
    %v1520 = vld [vmem:[#allocation8 + $0x48] sm:$0xf]
    %v1521 = vld [vmem:[#allocation8 + $0x4c] sm:$0xf]
    %v1522 = vld [vmem:[#allocation8 + $0x50] sm:$0xf]
    %v1523 = vld [vmem:[#allocation8 + $0x54] sm:$0xf]
    %v1524 = vld [vmem:[#allocation8 + $0x58] sm:$0xf]
    %v1525 = vld [vmem:[#allocation8 + $0x5c] sm:$0xf]
    %v1526 = vld [vmem:[#allocation8 + $0x60] sm:$0xf]
    %v1527 = vld [vmem:[#allocation8 + $0x64] sm:$0xf]
    %v1528 = vld [vmem:[#allocation8 + $0x68] sm:$0xf]
    %v1529 = vld [vmem:[#allocation8 + $0x6c] sm:$0xf]
    %v1530 = vld [vmem:[#allocation8 + $0x70] sm:$0xf]
    %v1531 = vld [vmem:[#allocation8 + $0x74] sm:$0xf]
    %v1532 = vld [vmem:[#allocation8 + $0x78] sm:$0xf]
    %v1533 = vld [vmem:[#allocation8 + $0x7c] sm:$0xf]
    %v1534 = vld [vmem:[#allocation8 + $0x80] sm:$0xf]
    %v1535 = vld [vmem:[#allocation8 + $0x84] sm:$0xf]
    %v1536 = vld [vmem:[#allocation8 + $0x88] sm:$0xf]
    %v1537 = vld [vmem:[#allocation8 + $0x8c] sm:$0xf]
    %v1538 = vld [vmem:[#allocation8 + $0x90] sm:$0xf]
    %v1539 = vld [vmem:[#allocation8 + $0x94] sm:$0xf]
    %v1540 = vld [vmem:[#allocation8 + $0x98] sm:$0xf]
    %v1541 = vld [vmem:[#allocation8 + $0x9c] sm:$0xf]
    %v1542 = vld [vmem:[#allocation8 + $0xa0] sm:$0xf]
    %v1543 = vld [vmem:[#allocation8 + $0xa4] sm:$0xf]
    %v1544 = vld [vmem:[#allocation8 + $0xa8] sm:$0xf]
    %v1545 = vld [vmem:[#allocation8 + $0xac] sm:$0xf]
    %v1546 = vld [vmem:[#allocation8 + $0xb0] sm:$0xf]
    %v1547 = vld [vmem:[#allocation8 + $0xb4] sm:$0xf]
    %v1548 = vld [vmem:[#allocation8 + $0xb8] sm:$0xf]
    %v1549 = vld [vmem:[#allocation8 + $0xbc] sm:$0xf]
    %v1550 = vld [vmem:[#allocation8 + $0xc0] sm:$0xf]
    %v1551 = vld [vmem:[#allocation8 + $0xc4] sm:$0xf]
    %v1552 = vld [vmem:[#allocation8 + $0xc8] sm:$0xf]
    %v1553 = vld [vmem:[#allocation8 + $0xcc] sm:$0xf]
    %v1554 = vld [vmem:[#allocation8 + $0xd0] sm:$0xf]
    %v1555 = vld [vmem:[#allocation8 + $0xd4] sm:$0xf]
    %v1556 = vld [vmem:[#allocation8 + $0xd8] sm:$0xf]
    %v1557 = vld [vmem:[#allocation8 + $0xdc] sm:$0xf]
    %v1558 = vld [vmem:[#allocation8 + $0xe0] sm:$0xf]
    %v1559 = vld [vmem:[#allocation8 + $0xe4] sm:$0xf]
    %v1560 = vld [vmem:[#allocation8 + $0xe8] sm:$0xf]
    %v1561 = vld [vmem:[#allocation8 + $0xec] sm:$0xf]
    %v1562 = vld [vmem:[#allocation8 + $0xf0] sm:$0xf]
    %v1563 = vld [vmem:[#allocation8 + $0xf4] sm:$0xf]
    %v1564 = vld [vmem:[#allocation8 + $0xf8] sm:$0xf]
    %v1565 = vld [vmem:[#allocation8 + $0xfc] sm:$0xf]
    %v1566 = vld [vmem:[#allocation8 + $0x100] sm:$0xf]
    %v1567 = vld [vmem:[#allocation8 + $0x104] sm:$0xf]
    %v1568 = vld [vmem:[#allocation8 + $0x108] sm:$0xf]
    %v1569 = vld [vmem:[#allocation8 + $0x10c] sm:$0xf]
    %v1570 = vld [vmem:[#allocation8 + $0x110] sm:$0xf]
    %v1571 = vld [vmem:[#allocation8 + $0x114] sm:$0xf]
    %v1572 = vld [vmem:[#allocation8 + $0x118] sm:$0xf]
    %v1573 = vld [vmem:[#allocation8 + $0x11c] sm:$0xf]
    %v1574 = vld [vmem:[#allocation8 + $0x120] sm:$0xf]
    %v1575 = vld [vmem:[#allocation8 + $0x124] sm:$0xf]
    %v1576 = vld [vmem:[#allocation8 + $0x128] sm:$0xf]
    %v1577 = vld [vmem:[#allocation8 + $0x12c] sm:$0xf]
    %v1578 = vld [vmem:[#allocation8 + $0x130] sm:$0xf]
    %v1579 = vld [vmem:[#allocation8 + $0x134] sm:$0xf]
    %v1580 = vld [vmem:[#allocation8 + $0x138] sm:$0xf]
    %v1581 = vld [vmem:[#allocation8 + $0x13c] sm:$0xf]
    %v1582 = vld [vmem:[#allocation8 + $0x140] sm:$0xf]
    %v1583 = vld [vmem:[#allocation8 + $0x144] sm:$0xf]
    %v1584 = vld [vmem:[#allocation8 + $0x148] sm:$0xf]
    %v1585 = vld [vmem:[#allocation8 + $0x14c] sm:$0xf]
    %v1586 = vld [vmem:[#allocation8 + $0x150] sm:$0xf]
    %v1587 = vld [vmem:[#allocation8 + $0x154] sm:$0xf]
    %v1588 = vld [vmem:[#allocation8 + $0x158] sm:$0xf]
    %v1589 = vld [vmem:[#allocation8 + $0x15c] sm:$0xf]
    %v1590 = vld [vmem:[#allocation8 + $0x160] sm:$0xf]
    %v1591 = vld [vmem:[#allocation8 + $0x164] sm:$0xf]
    %v1592 = vld [vmem:[#allocation8 + $0x168] sm:$0xf]
    %v1593 = vld [vmem:[#allocation8 + $0x16c] sm:$0xf]
    %v1594 = vld [vmem:[#allocation8 + $0x170] sm:$0xf]
    %v1595 = vld [vmem:[#allocation8 + $0x174] sm:$0xf]
    %v1596 = vld [vmem:[#allocation8 + $0x178] sm:$0xf]
    %v1597 = vld [vmem:[#allocation8 + $0x17c] sm:$0xf]
    %v1598 = vld [vmem:[%s5] sm:$0x1]
    %v1600 = vlaneseq
    %v1601 = vshrl.u32 %v1600, 7
    %v1602 = vsub.s32 0, %v1601
    %v1603 = vrot.slane %v1598, %v1602
    %v1608 = vunpack.c.l.b16 %v1499
    %v1609 = vunpack.c.h.b16 %v1499
    %v1610 = vunpack.c.l.b16 %v1500
    %v1611 = vunpack.c.h.b16 %v1500
    %v1612 = vunpack.c.l.b16 %v1501
    %v1613 = vunpack.c.h.b16 %v1501
    %v1614 = vpack.c.b16 %v1608, %v1608
    %v1615 = vpack.c.b16 %v1609, %v1609
    %v1616 = vpack.c.b16 %v1610, %v1610
    %v1617 = vpack.c.b16 %v1611, %v1611
    %v1618 = vpack.c.b16 %v1612, %v1612
    %v1619 = vpack.c.b16 %v1613, %v1613
    %v1722 = vunpack.c.l.b16 %v1502
    %v1723 = vunpack.c.l.b16 %v1503
    %v1724 = vunpack.c.l.b16 %v1504
    %v1725 = vunpack.c.l.b16 %v1505
    %v1726 = vunpack.c.l.b16 %v1506
    %v1727 = vunpack.c.l.b16 %v1507
    %v1728 = vunpack.c.l.b16 %v1508
    %v1729 = vunpack.c.l.b16 %v1509
    %v1730 = vunpack.c.l.b16 %v1510
    %v1731 = vunpack.c.l.b16 %v1511
    %v1732 = vunpack.c.l.b16 %v1512
    %v1733 = vunpack.c.l.b16 %v1513
    %v1734 = vunpack.c.l.b16 %v1514
    %v1735 = vunpack.c.l.b16 %v1515
    %v1736 = vunpack.c.l.b16 %v1516
    %v1737 = vunpack.c.l.b16 %v1517
    %v1738 = vunpack.c.l.b16 %v1518
    %v1739 = vunpack.c.l.b16 %v1519
    %v1740 = vunpack.c.l.b16 %v1520
    %v1741 = vunpack.c.l.b16 %v1521
    %v1742 = vunpack.c.l.b16 %v1522
    %v1743 = vunpack.c.l.b16 %v1523
    %v1744 = vunpack.c.l.b16 %v1524
    %v1745 = vunpack.c.l.b16 %v1525
    %v1746 = vunpack.c.l.b16 %v1526
    %v1747 = vunpack.c.l.b16 %v1527
    %v1748 = vunpack.c.l.b16 %v1528
    %v1749 = vunpack.c.l.b16 %v1529
    %v1750 = vunpack.c.l.b16 %v1530
    %v1751 = vunpack.c.l.b16 %v1531
    %v1752 = vunpack.c.l.b16 %v1532
    %v1753 = vunpack.c.l.b16 %v1533
    %v1754 = vunpack.c.l.b16 %v1534
    %v1755 = vunpack.c.l.b16 %v1535
    %v1756 = vunpack.c.l.b16 %v1536
    %v1757 = vunpack.c.l.b16 %v1537
    %v1758 = vunpack.c.l.b16 %v1538
    %v1759 = vunpack.c.l.b16 %v1539
    %v1760 = vunpack.c.l.b16 %v1540
    %v1761 = vunpack.c.l.b16 %v1541
    %v1762 = vunpack.c.l.b16 %v1542
    %v1763 = vunpack.c.l.b16 %v1543
    %v1764 = vunpack.c.l.b16 %v1544
    %v1765 = vunpack.c.l.b16 %v1545
    %v1766 = vunpack.c.l.b16 %v1546
    %v1767 = vunpack.c.l.b16 %v1547
    %v1768 = vunpack.c.l.b16 %v1548
    %v1769 = vunpack.c.l.b16 %v1549
    %v1770 = vunpack.c.l.b16 %v1550
    %v1771 = vunpack.c.l.b16 %v1551
    %v1772 = vunpack.c.l.b16 %v1552
    %v1773 = vunpack.c.l.b16 %v1553
    %v1774 = vunpack.c.l.b16 %v1554
    %v1775 = vunpack.c.l.b16 %v1555
    %v1776 = vunpack.c.l.b16 %v1556
    %v1777 = vunpack.c.l.b16 %v1557
    %v1778 = vunpack.c.l.b16 %v1558
    %v1779 = vunpack.c.l.b16 %v1559
    %v1780 = vunpack.c.l.b16 %v1560
    %v1781 = vunpack.c.l.b16 %v1561
    %v1782 = vunpack.c.l.b16 %v1562
    %v1783 = vunpack.c.l.b16 %v1563
    %v1784 = vunpack.c.l.b16 %v1564
    %v1785 = vunpack.c.l.b16 %v1565
    %v1786 = vunpack.c.l.b16 %v1566
    %v1787 = vunpack.c.l.b16 %v1567
    %v1788 = vunpack.c.l.b16 %v1568
    %v1789 = vunpack.c.l.b16 %v1569
    %v1790 = vunpack.c.l.b16 %v1570
    %v1791 = vunpack.c.l.b16 %v1571
    %v1792 = vunpack.c.l.b16 %v1572
    %v1793 = vunpack.c.l.b16 %v1573
    %v1794 = vunpack.c.l.b16 %v1574
    %v1795 = vunpack.c.l.b16 %v1575
    %v1796 = vunpack.c.l.b16 %v1576
    %v1797 = vunpack.c.l.b16 %v1577
    %v1798 = vunpack.c.l.b16 %v1578
    %v1799 = vunpack.c.l.b16 %v1579
    %v1800 = vunpack.c.l.b16 %v1580
    %v1801 = vunpack.c.l.b16 %v1581
    %v1802 = vunpack.c.l.b16 %v1582
    %v1803 = vunpack.c.l.b16 %v1583
    %v1804 = vunpack.c.l.b16 %v1584
    %v1805 = vunpack.c.l.b16 %v1585
    %v1806 = vunpack.c.l.b16 %v1586
    %v1807 = vunpack.c.l.b16 %v1587
    %v1808 = vunpack.c.l.b16 %v1588
    %v1809 = vunpack.c.l.b16 %v1589
    %v1810 = vunpack.c.l.b16 %v1590
    %v1811 = vunpack.c.l.b16 %v1591
    %v1812 = vunpack.c.l.b16 %v1592
    %v1813 = vunpack.c.l.b16 %v1593
    %v1814 = vunpack.c.l.b16 %v1594
    %v1815 = vunpack.c.l.b16 %v1595
    %v1816 = vunpack.c.l.b16 %v1596
    %v1817 = vunpack.c.l.b16 %v1597
    %v1818 = vpack.c.b16 %v1723, %v1722
    %v1819 = vpack.c.b16 %v1725, %v1724
    %v1820 = vpack.c.b16 %v1727, %v1726
    %v1821 = vpack.c.b16 %v1729, %v1728
    %v1822 = vpack.c.b16 %v1731, %v1730
    %v1823 = vpack.c.b16 %v1733, %v1732
    %v1824 = vpack.c.b16 %v1735, %v1734
    %v1825 = vpack.c.b16 %v1737, %v1736
    %v1826 = vpack.c.b16 %v1739, %v1738
    %v1827 = vpack.c.b16 %v1741, %v1740
    %v1828 = vpack.c.b16 %v1743, %v1742
    %v1829 = vpack.c.b16 %v1745, %v1744
    %v1830 = vpack.c.b16 %v1747, %v1746
    %v1831 = vpack.c.b16 %v1749, %v1748
    %v1832 = vpack.c.b16 %v1751, %v1750
    %v1833 = vpack.c.b16 %v1753, %v1752
    %v1834 = vpack.c.b16 %v1755, %v1754
    %v1835 = vpack.c.b16 %v1757, %v1756
    %v1836 = vpack.c.b16 %v1759, %v1758
    %v1837 = vpack.c.b16 %v1761, %v1760
    %v1838 = vpack.c.b16 %v1763, %v1762
    %v1839 = vpack.c.b16 %v1765, %v1764
    %v1840 = vpack.c.b16 %v1767, %v1766
    %v1841 = vpack.c.b16 %v1769, %v1768
    %v1842 = vpack.c.b16 %v1771, %v1770
    %v1843 = vpack.c.b16 %v1773, %v1772
    %v1844 = vpack.c.b16 %v1775, %v1774
    %v1845 = vpack.c.b16 %v1777, %v1776
    %v1846 = vpack.c.b16 %v1779, %v1778
    %v1847 = vpack.c.b16 %v1781, %v1780
    %v1848 = vpack.c.b16 %v1783, %v1782
    %v1849 = vpack.c.b16 %v1785, %v1784
    %v1850 = vpack.c.b16 %v1787, %v1786
    %v1851 = vpack.c.b16 %v1789, %v1788
    %v1852 = vpack.c.b16 %v1791, %v1790
    %v1853 = vpack.c.b16 %v1793, %v1792
    %v1854 = vpack.c.b16 %v1795, %v1794
    %v1855 = vpack.c.b16 %v1797, %v1796
    %v1856 = vpack.c.b16 %v1799, %v1798
    %v1857 = vpack.c.b16 %v1801, %v1800
    %v1858 = vpack.c.b16 %v1803, %v1802
    %v1859 = vpack.c.b16 %v1805, %v1804
    %v1860 = vpack.c.b16 %v1807, %v1806
    %v1861 = vpack.c.b16 %v1809, %v1808
    %v1862 = vpack.c.b16 %v1811, %v1810
    %v1863 = vpack.c.b16 %v1813, %v1812
    %v1864 = vpack.c.b16 %v1815, %v1814
    %v1865 = vpack.c.b16 %v1817, %v1816
    %1914 = vmatprep.subr.bf16.mxu0 0
    %1915 = vmatpush1.bf16.msra.mxu0 %v1818
    %1916 = vmatprep.subr.bf16.mxu0 0
    %1917 = vmatpush1.bf16.msra.mxu0 %v1819
    %1918 = vmatprep.subr.bf16.mxu0 0
    %1919 = vmatpush1.bf16.msra.mxu0 %v1820
    %1920 = vmatprep.subr.bf16.mxu0 0
    %1921 = vmatpush1.bf16.msra.mxu0 %v1821
    %1922 = vmatprep.subr.bf16.mxu0 0
    %1923 = vmatpush1.bf16.msra.mxu0 %v1822
    %1924 = vmatprep.subr.bf16.mxu0 0
    %1925 = vmatpush1.bf16.msra.mxu0 %v1823
    %1926 = vmatprep.subr.bf16.mxu0 0
    %1927 = vmatpush1.bf16.msra.mxu0 %v1824
    %1928 = vmatprep.subr.bf16.mxu0 0
    %1929 = vmatpush1.bf16.msra.mxu0 %v1825
    %1930 = vmatprep.subr.bf16.mxu0 0
    %1931 = vmatpush1.bf16.msra.mxu0 %v1826
    %1932 = vmatprep.subr.bf16.mxu0 0
    %1933 = vmatpush1.bf16.msra.mxu0 %v1827
    %1934 = vmatprep.subr.bf16.mxu0 0
    %1935 = vmatpush1.bf16.msra.mxu0 %v1828
    %1936 = vmatprep.subr.bf16.mxu0 0
    %1937 = vmatpush1.bf16.msra.mxu0 %v1829
    %1938 = vmatprep.subr.bf16.mxu0 0
    %1939 = vmatpush1.bf16.msra.mxu0 %v1830
    %1940 = vmatprep.subr.bf16.mxu0 0
    %1941 = vmatpush1.bf16.msra.mxu0 %v1831
    %1942 = vmatprep.subr.bf16.mxu0 0
    %1943 = vmatpush1.bf16.msra.mxu0 %v1832
    %1944 = vmatprep.subr.bf16.mxu0 0
    %1945 = vmatpush1.bf16.msra.mxu0 %v1833
    %1946 = vmatprep.mubr.bf16.mxu0 %v1615
    %1947 = vmatmul.mubr.bf16.gmra.mrb[0].mxu0 %v1614
    %v1948 = vpop.f32.mrb[0].mxu0
    %v1949 = vadd.f32 %v1603, %v1948
    %v1950 = vpop.f32.mrb[0].mxu0
    %v1951 = vpop.f32.mrb[0].mxu0
    %v1952 = vpop.f32.mrb[0].mxu0
    %1953 = vdwg.mxu0
    %1954 = vmatprep.subr.bf16.mxu0 0
    %1955 = vmatpush1.bf16.msra.mxu0 %v1834
    %1956 = vmatprep.subr.bf16.mxu0 0
    %1957 = vmatpush1.bf16.msra.mxu0 %v1835
    %1958 = vmatprep.subr.bf16.mxu0 0
    %1959 = vmatpush1.bf16.msra.mxu0 %v1836
    %1960 = vmatprep.subr.bf16.mxu0 0
    %1961 = vmatpush1.bf16.msra.mxu0 %v1837
    %1962 = vmatprep.subr.bf16.mxu0 0
    %1963 = vmatpush1.bf16.msra.mxu0 %v1838
    %1964 = vmatprep.subr.bf16.mxu0 0
    %1965 = vmatpush1.bf16.msra.mxu0 %v1839
    %1966 = vmatprep.subr.bf16.mxu0 0
    %1967 = vmatpush1.bf16.msra.mxu0 %v1840
    %1968 = vmatprep.subr.bf16.mxu0 0
    %1969 = vmatpush1.bf16.msra.mxu0 %v1841
    %1970 = vmatprep.subr.bf16.mxu0 0
    %1971 = vmatpush1.bf16.msra.mxu0 %v1842
    %1972 = vmatprep.subr.bf16.mxu0 0
    %1973 = vmatpush1.bf16.msra.mxu0 %v1843
    %1974 = vmatprep.subr.bf16.mxu0 0
    %1975 = vmatpush1.bf16.msra.mxu0 %v1844
    %1976 = vmatprep.subr.bf16.mxu0 0
    %1977 = vmatpush1.bf16.msra.mxu0 %v1845
    %1978 = vmatprep.subr.bf16.mxu0 0
    %1979 = vmatpush1.bf16.msra.mxu0 %v1846
    %1980 = vmatprep.subr.bf16.mxu0 0
    %1981 = vmatpush1.bf16.msra.mxu0 %v1847
    %1982 = vmatprep.subr.bf16.mxu0 0
    %1983 = vmatpush1.bf16.msra.mxu0 %v1848
    %1984 = vmatprep.subr.bf16.mxu0 0
    %1985 = vmatpush1.bf16.msra.mxu0 %v1849
    %1986 = vmatprep.mubr.bf16.mxu0 %v1617
    %1987 = vmatmul.mubr.bf16.gmra.mrb[0].mxu0 %v1616
    %v1988 = vpop.f32.mrb[0].mxu0
    %v1989 = vadd.f32 %v1949, %v1988
    %v1990 = vpop.f32.mrb[0].mxu0
    %v1991 = vpop.f32.mrb[0].mxu0
    %v1992 = vpop.f32.mrb[0].mxu0
    %1993 = vdwg.mxu0
    %1994 = vmatprep.subr.bf16.mxu0 0
    %1995 = vmatpush1.bf16.msra.mxu0 %v1850
    %1996 = vmatprep.subr.bf16.mxu0 0
    %1997 = vmatpush1.bf16.msra.mxu0 %v1851
    %1998 = vmatprep.subr.bf16.mxu0 0
    %1999 = vmatpush1.bf16.msra.mxu0 %v1852
    %2000 = vmatprep.subr.bf16.mxu0 0
    %2001 = vmatpush1.bf16.msra.mxu0 %v1853
    %2002 = vmatprep.subr.bf16.mxu0 0
    %2003 = vmatpush1.bf16.msra.mxu0 %v1854
    %2004 = vmatprep.subr.bf16.mxu0 0
    %2005 = vmatpush1.bf16.msra.mxu0 %v1855
    %2006 = vmatprep.subr.bf16.mxu0 0
    %2007 = vmatpush1.bf16.msra.mxu0 %v1856
    %2008 = vmatprep.subr.bf16.mxu0 0
    %2009 = vmatpush1.bf16.msra.mxu0 %v1857
    %2010 = vmatprep.subr.bf16.mxu0 0
    %2011 = vmatpush1.bf16.msra.mxu0 %v1858
    %2012 = vmatprep.subr.bf16.mxu0 0
    %2013 = vmatpush1.bf16.msra.mxu0 %v1859
    %2014 = vmatprep.subr.bf16.mxu0 0
    %2015 = vmatpush1.bf16.msra.mxu0 %v1860
    %2016 = vmatprep.subr.bf16.mxu0 0
    %2017 = vmatpush1.bf16.msra.mxu0 %v1861
    %2018 = vmatprep.subr.bf16.mxu0 0
    %2019 = vmatpush1.bf16.msra.mxu0 %v1862
    %2020 = vmatprep.subr.bf16.mxu0 0
    %2021 = vmatpush1.bf16.msra.mxu0 %v1863
    %2022 = vmatprep.subr.bf16.mxu0 0
    %2023 = vmatpush1.bf16.msra.mxu0 %v1864
    %2024 = vmatprep.subr.bf16.mxu0 0
    %2025 = vmatpush1.bf16.msra.mxu0 %v1865
    %2026 = vmatprep.mubr.bf16.mxu0 %v1619
    %2027 = vmatmul.mubr.bf16.gmra.mrb[0].mxu0 %v1618
    %v2028 = vpop.f32.mrb[0].mxu0
    %v2029 = vadd.f32 %v1989, %v2028
    %v2030 = vpop.f32.mrb[0].mxu0
    %v2031 = vpop.f32.mrb[0].mxu0
    %v2032 = vpop.f32.mrb[0].mxu0
    %2033 = vdwg.mxu0
    %2034 = vmax.xlane.f32.xlu0 %v1494
    %v2035 = vpop.xlane.xlu0 %2034
    %2036 = vmax.xlane.f32.xlu0 %v2029
    %v2037 = vpop.xlane.xlu0 %2036
    %v2038 = vsub.f32 %v1494, %v2035
    %v2039 = vmul.f32 %v2038, 1.442695
    %v2040 = vpow.pop %v2039
    %v2041 = vsub.f32 %v2029, %v2037
    %v2042 = vmul.f32 %v2041, 1.442695
    %v2043 = vpow.pop %v2042
    %2044 = vadd.xlane.f32.xlu0 %v2040
    %v2045 = vpop.xlane.xlu0 %2044
    %2046 = vadd.xlane.f32.xlu0 %v2043
    %v2047 = vpop.xlane.xlu0 %2046
    %v2048 = vlog2.pop %v2045
    %v2049 = vmul.f32 %v2048, 0.6931472
    %v2050 = vsub.f32 %v2038, %v2049
    %v2051 = vlog2.pop %v2047
    %v2052 = vmul.f32 %v2051, 0.6931472
    %v2053 = vsub.f32 %v2041, %v2052
    %v2054 = vrcp.pop %v2045
    %v2055 = vmul.f32 %v2040, %v2054
    %v2056 = vrcp.pop %v2047
    %v2057 = vmul.f32 %v2043, %v2056
    %v2058 = vadd.f32 %v2055, %v2057
    %v2059 = vmul.f32 %v2058, 0.5
    %v2060 = vadd.f32 %v2059, 1e-09
    %v2061 = vlog2.pop %v2060
    %v2062 = vmul.f32 %v2061, 0.6931472
    %v2063 = vpack.c.bf16 %v2050, %v2050
    %2064 = vst [vmem:[#allocation10] sm:$0xf] %v2063
    %v2065 = vpack.c.bf16 %v2053, %v2053
    %2066 = vst [vmem:[#allocation11] sm:$0xf] %v2065
    %v2067 = vpack.c.bf16 %v2062, %v2062
    %2068 = vst [vmem:[#allocation13] sm:$0xf] %v2067
    %v2069 = vlaneseq
    %v2070 = vand.u32 %v2069, 127
    %v2071 = vld [vmem:[%s6] sm:$0xff]
    %2072 = vset.pattern.permute.xlu0 0
    %2073 = vperm.xlu0 %2072, %v2071
    %v2074 = vpop.permute.xlu0 %2073
    %vm2075 = vcmp.eq.s32.totalorder %v2070, %v2074
    %v2076 = vsel %vm2075, 1, 0
    %v2077 = vcvt.s32.f32 %v2076
    %v2078 = vmul.f32 %v2062, %v2077
    %2079 = vadd.xlane.f32.xlu0 %v2078
    %v2080 = vpop.xlane.xlu0 %2079
    %v2081 = vsub.f32 0.0, %v2080
    %vm2082 = vcmask 7168
    %2083 = vst.msk [vmem:[%s10] sm:$0xff] %vm2082, %v2081
    // Predicated region
    $region46: #{tpu_custom_call.1} parent=1 // pred_check
      _
    $region47: #{tpu_custom_call.1} parent=1 // pred_check_branch
      %2085 = sbr.rel (0) target = $region49
    $region48: #{tpu_custom_call.1} parent=1 // pred_region
      %s2087 = ssub.s32 64, 64
      %2088 = vsyncadd [#allocation4], %s2087
      %s2090 = sshll.u32 [#allocation10], 4
      %s2091 = int_to_ptr.vmem [resolvable:$true] %s2090
      %2093 = dma.vmem_to_hbm [thread:$0]  %s2091, 64, %s7, [#allocation4]
    $region49: #{tpu_custom_call.1} parent=1 // pred_fallthru
      _
    // Predicated region
    $region50: #{tpu_custom_call.1} parent=1 // pred_check
      _
    $region51: #{tpu_custom_call.1} parent=1 // pred_check_branch
      %2095 = sbr.rel (0) target = $region53
    $region52: #{tpu_custom_call.1} parent=1 // pred_region
      %s2097 = ssub.s32 64, 64
      %2098 = vsyncadd [#allocation12], %s2097
      %s2100 = sshll.u32 [#allocation11], 4
      %s2101 = int_to_ptr.vmem [resolvable:$true] %s2100
      %2103 = dma.vmem_to_hbm [thread:$0]  %s2101, 64, %s8, [#allocation12]
    $region53: #{tpu_custom_call.1} parent=1 // pred_fallthru
      _
    // Predicated region
    $region54: #{tpu_custom_call.1} parent=1 // pred_check
      _
    $region55: #{tpu_custom_call.1} parent=1 // pred_check_branch
      %2105 = sbr.rel (0) target = $region57
    $region56: #{tpu_custom_call.1} parent=1 // pred_region
      %s2107 = ssub.s32 64, 64
      %2108 = vsyncadd [#allocation12], %s2107
      %s2110 = sshll.u32 [#allocation13], 4
      %s2111 = int_to_ptr.vmem [resolvable:$true] %s2110
      %2113 = dma.vmem_to_hbm [thread:$0]  %s2111, 64, %s9, [#allocation12]
    $region57: #{tpu_custom_call.1} parent=1 // pred_fallthru
      _
    // Predicated region
    $region58: #{tpu_custom_call.1} parent=1 // pred_check
      _
    $region59: #{tpu_custom_call.1} parent=1 // pred_check_branch
      %2115 = sbr.rel (0) target = $region61
    $region60: #{tpu_custom_call.1} parent=1 // pred_region
      _
    $region61: #{tpu_custom_call.1} parent=1 // pred_fallthru
      _
    // Predicated region
    $region62: #{tpu_custom_call.1} parent=1 // pred_check
      _
    $region63: #{tpu_custom_call.1} parent=1 // pred_check_branch
      %2117 = sbr.rel (0) target = $region65
    $region64: #{tpu_custom_call.1} parent=1 // pred_region
      %2118 = dma.done [#allocation4], 64
    $region65: #{tpu_custom_call.1} parent=1 // pred_fallthru
      _
    // Predicated region
    $region66: #{tpu_custom_call.1} parent=1 // pred_check
      _
    $region67: #{tpu_custom_call.1} parent=1 // pred_check_branch
      %2120 = sbr.rel (0) target = $region69
    $region68: #{tpu_custom_call.1} parent=1 // pred_region
      %2121 = dma.done [#allocation12], 64
    $region69: #{tpu_custom_call.1} parent=1 // pred_fallthru
      _
    // Predicated region
    $region70: #{tpu_custom_call.1} parent=1 // pred_check
      _
    $region71: #{tpu_custom_call.1} parent=1 // pred_check_branch
      %2123 = sbr.rel (0) target = $region73
    $region72: #{tpu_custom_call.1} parent=1 // pred_region
      %2124 = dma.done [#allocation12], 64
    $region73: #{tpu_custom_call.1} parent=1 // pred_fallthru
      _
    // Predicated region
    $region74: #{tpu_custom_call.1} parent=1 // pred_check
      _
    $region75: #{tpu_custom_call.1} parent=1 // pred_check_branch
      %2126 = sbr.rel (0) target = $region77
    $region76: #{tpu_custom_call.1} parent=1 // pred_region
      _
    $region77: #{tpu_custom_call.1} parent=1 // pred_fallthru
      _
    %2127 = vsyncpa [#allocation3], 1
    %2128 = vsyncpa [#allocation6], 1
    %2129 = vsyncpa [#allocation9], 1
    %2130 = vsyncpa [#allocation4], 1
    %2131 = vsyncpa [#allocation12], 1

</llo_original>
